<compile_context>
chip_gen: v6e
topology: v6e:2x2x1
jax: 0.10.0
libtpu: 0.0.40
codegen_flags: <defaults>
</compile_context>

<pallas_src>
import jax
import jax.numpy as jnp
from jax.experimental import pallas as pl
from jax.experimental.pallas import tpu as pltpu


# ----------------------------------------------------------------------------
# Single fused kernel: time-parallel input projection (both directions), then
# the serial bidirectional GRU recurrence (directions fused per step), then a
# single fc+tanh matmul on the final states.
# ----------------------------------------------------------------------------
def _bigru_encoder_kernel(x_ref,            # (T*B, E)   flattened embeddings
                          wih_ref,          # (E, 6H)    [W_ih_f | W_ih_b]
                          whh_ref,          # (2H, 3H)   [W_hh_f ; W_hh_b]
                          bih_ref,          # (1, 6H)    [b_ih_f | b_ih_b]
                          bhhf_ref,         # (1, 3H)
                          bhhb_ref,         # (1, 3H)
                          fcw_ref,          # (2H, D)
                          fcb_ref,          # (1, D)
                          out_ref,          # (T, B, 2H) fused bi-dir outputs
                          hid_ref,          # (B, D)     tanh(fc([h_f; h_b]))
                          gi_scratch):      # VMEM (T, B, 6H)
    T, B, H2 = out_ref.shape
    H = H2 // 2

    # ---- Phase 1: hoisted, time-parallel input projection (one MXU matmul
    # covering all timesteps and both directions).
    gi2 = (jnp.dot(x_ref[...], wih_ref[...],
                   preferred_element_type=jnp.float32)
           + bih_ref[...])                                   # (T*B, 6H)
    gi_scratch[...] = gi2.reshape(T, B, 6 * H)

    # Hoist all loop-invariant values out of the recurrence (JAX does not CSE
    # broadcasts, so build them once here).
    whh = whh_ref[...]                                       # (2H, 3H)
    bhh_all = jnp.concatenate(
        [jnp.broadcast_to(bhhf_ref[...], (B, 3 * H)),
         jnp.broadcast_to(bhhb_ref[...], (B, 3 * H))], axis=0)   # (2B, 3H)
    zer = jnp.zeros((B, H), jnp.float32)

    # ---- Phase 2: serial recurrence, both directions fused per step.
    def step(t, carry):
        h_f, h_b = carry                                     # (B, H) each
        rev = T - 1 - t

        gi_t = gi_scratch[t]                                 # (B, 6H) view
        gi_r = gi_scratch[rev]                               # (B, 6H) view
        # Stack forward (time t, cols 0:3H) and backward (time rev, 3H:6H).
        gi_all = jnp.concatenate(
            [gi_t[:, 0:3 * H], gi_r[:, 3 * H:6 * H]], axis=0)    # (2B, 3H)

        # Block-diagonal recurrent projection: one MXU matmul for both dirs.
        h_blk = jnp.concatenate(
            [jnp.concatenate([h_f, zer], axis=1),
             jnp.concatenate([zer, h_b], axis=1)], axis=0)       # (2B, 2H)
        gh = (jnp.dot(h_blk, whh, preferred_element_type=jnp.float32)
              + bhh_all)                                         # (2B, 3H)

        # PyTorch GRU gate order (r, z, n), computed once on (2B, *) tensors.
        r = jax.nn.sigmoid(gi_all[:, 0 * H:1 * H] + gh[:, 0 * H:1 * H])
        z = jax.nn.sigmoid(gi_all[:, 1 * H:2 * H] + gh[:, 1 * H:2 * H])
        n = jnp.tanh(gi_all[:, 2 * H:3 * H] + r * gh[:, 2 * H:3 * H])
        h_prev = jnp.concatenate([h_f, h_b], axis=0)             # (2B, H)
        h_new = (1.0 - z) * n + z * h_prev

        h_f_new = h_new[0:B, :]
        h_b_new = h_new[B:2 * B, :]
        out_ref[t, :, 0:H] = h_f_new          # hidden after consuming x[0..t]
        out_ref[rev, :, H:2 * H] = h_b_new    # hidden after consuming x[rev..T-1]
        return (h_f_new, h_b_new)

    h0 = jnp.zeros((B, H), jnp.float32)
    h_f_fin, h_b_fin = jax.lax.fori_loop(0, T, step, (h0, h0),
                                         unroll=min(8, T))

    # ---- Phase 3: fused fc + tanh on [h_f_final ; h_b_final] (one matmul).
    h_cat = jnp.concatenate([h_f_fin, h_b_fin], axis=1)          # (B, 2H)
    hid_ref[...] = jnp.tanh(
        jnp.dot(h_cat, fcw_ref[...], preferred_element_type=jnp.float32)
        + fcb_ref[...])


# ----------------------------------------------------------------------------
# One-time parameter packing (done once, NOT per forward call).
# ----------------------------------------------------------------------------
def pack_encoder_params(params):
    packed = dict(params)
    packed["w_ih_both"] = jnp.concatenate(
        [params["w_ih_f"], params["w_ih_b"]], axis=1)            # (E, 6H)
    packed["b_ih_both"] = jnp.concatenate(
        [params["b_ih_f"], params["b_ih_b"]], axis=1)            # (1, 6H)
    packed["w_hh_stack"] = jnp.concatenate(
        [params["w_hh_f"], params["w_hh_b"]], axis=0)            # (2H, 3H)
    return packed


# ----------------------------------------------------------------------------
# Encoder forward (mirrors the PyTorch encoder used by Seq2Seq.forward).
# ----------------------------------------------------------------------------
def encoder_forward(src, packed):
    """src: (T, B) int32.  Returns (outputs (T,B,2H), hidden (B,dec_hid))."""
    T, B = src.shape
    E = packed["embedding"].shape[1]
    H = packed["w_hh_f"].shape[0]
    D = packed["fc_w"].shape[1]

    # Embedding lookup (glue) + dropout (identity at inference).
    embedded = jnp.take(packed["embedding"], src, axis=0).astype(jnp.float32)
    x2d = embedded.reshape(T * B, E)                 # row t*B+b = x[t, b]

    outputs, hidden = pl.pallas_call(
        _bigru_encoder_kernel,
        out_shape=(
            jax.ShapeDtypeStruct((T, B, 2 * H), jnp.float32),
            jax.ShapeDtypeStruct((B, D), jnp.float32),
        ),
        scratch_shapes=[pltpu.VMEM((T, B, 6 * H), jnp.float32)],
        compiler_params=pltpu.CompilerParams(
            vmem_limit_bytes=32 * 1024 * 1024),
    )(x2d, packed["w_ih_both"], packed["w_hh_stack"], packed["b_ih_both"],
      packed["b_hh_f"], packed["b_hh_b"], packed["fc_w"], packed["fc_b"])

    return outputs, hidden


# ----------------------------------------------------------------------------
# Pure-JAX reference (lax.scan) for correctness verification.
# ----------------------------------------------------------------------------
def _gru_ref(x, w_ih, w_hh, b_ih, b_hh):
    H = w_hh.shape[0]

    def step(h, x_t):
        gi = x_t @ w_ih + b_ih
        gh = h @ w_hh + b_hh
        r = jax.nn.sigmoid(gi[:, :H] + gh[:, :H])
        z = jax.nn.sigmoid(gi[:, H:2 * H] + gh[:, H:2 * H])
        n = jnp.tanh(gi[:, 2 * H:] + r * gh[:, 2 * H:])
        h_new = (1.0 - z) * n + z * h
        return h_new, h_new

    h0 = jnp.zeros((x.shape[1], H), jnp.float32)
    _, hs = jax.lax.scan(step, h0, x)
    return hs


def encoder_ref(src, params):
    embedded = jnp.take(params["embedding"], src, axis=0).astype(jnp.float32)
    out_f = _gru_ref(embedded, params["w_ih_f"], params["w_hh_f"],
                     params["b_ih_f"], params["b_hh_f"])
    out_b = _gru_ref(embedded[::-1], params["w_ih_b"], params["w_hh_b"],
                     params["b_ih_b"], params["b_hh_b"])[::-1]
    outputs = jnp.concatenate([out_f, out_b], axis=-1)
    cat = jnp.concatenate([out_f[-1], out_b[0]], axis=-1)
    hidden = jnp.tanh(cat @ params["fc_w"] + params["fc_b"])
    return outputs, hidden


# ----------------------------------------------------------------------------
# Deterministic parameter init (shapes from the PyTorch encoder __init__).
# ----------------------------------------------------------------------------
def init_params(key, input_dim, emb_dim, enc_hid_dim, dec_hid_dim):
    ks = jax.random.split(key, 12)
    H, E = enc_hid_dim, emb_dim
    scale = 0.1

    def u(k, shape):
        return jax.random.uniform(k, shape, jnp.float32, -scale, scale)

    return {
        "embedding": u(ks[0], (input_dim, E)),
        # forward direction GRU weights (stored transposed for x @ W)
        "w_ih_f": u(ks[1], (E, 3 * H)),
        "w_hh_f": u(ks[2], (H, 3 * H)),
        "b_ih_f": u(ks[3], (1, 3 * H)),
        "b_hh_f": u(ks[4], (1, 3 * H)),
        # backward direction
        "w_ih_b": u(ks[5], (E, 3 * H)),
        "w_hh_b": u(ks[6], (H, 3 * H)),
        "b_ih_b": u(ks[7], (1, 3 * H)),
        "b_hh_b": u(ks[8], (1, 3 * H)),
        # fc: (2H -> dec_hid_dim)
        "fc_w": u(ks[9], (2 * H, dec_hid_dim)),
        "fc_b": u(ks[10], (1, dec_hid_dim)),
    }


if __name__ == "__main__":
    INPUT_DIM = 50     # vocab size
    EMB_DIM = 32
    ENC_HID_DIM = 32
    DEC_HID_DIM = 32
    T, B = 8, 2        # seq len, batch

    key = jax.random.PRNGKey(0)
    pkey, skey = jax.random.split(key)
    params = init_params(pkey, INPUT_DIM, EMB_DIM, ENC_HID_DIM, DEC_HID_DIM)
    packed = pack_encoder_params(params)          # one-time weight stacking
    src = jax.random.randint(skey, (T, B), 0, INPUT_DIM, dtype=jnp.int32)

    outputs, hidden = jax.block_until_ready(encoder_forward(src, packed))
    ref_outputs, ref_hidden = jax.block_until_ready(encoder_ref(src, params))

    assert outputs.shape == (T, B, 2 * ENC_HID_DIM)
    assert hidden.shape == (B, DEC_HID_DIM)
    assert jnp.allclose(outputs, ref_outputs, atol=1e-5, rtol=1e-5)
    assert jnp.allclose(hidden, ref_hidden, atol=1e-5, rtol=1e-5)

    print("KERNEL_OK")
</pallas_src>

<mosaic_0001>
module attributes {stable_mosaic.version = 11 : i64} {
  func.func @_bigru_encoder_kernel(%arg0: memref<16x32xf32, #tpu.memory_space<vmem>>, %arg1: memref<32x192xf32, #tpu.memory_space<vmem>>, %arg2: memref<64x96xf32, #tpu.memory_space<vmem>>, %arg3: memref<1x192xf32, #tpu.memory_space<vmem>>, %arg4: memref<1x96xf32, #tpu.memory_space<vmem>>, %arg5: memref<1x96xf32, #tpu.memory_space<vmem>>, %arg6: memref<64x32xf32, #tpu.memory_space<vmem>>, %arg7: memref<1x32xf32, #tpu.memory_space<vmem>>, %arg8: memref<8x2x64xf32, #tpu.memory_space<vmem>>, %arg9: memref<2x32xf32, #tpu.memory_space<vmem>>, %arg10: memref<8x2x192xf32, #tpu.memory_space<vmem>>) attributes {dimension_semantics = [], scalar_prefetch = 0 : i64, scratch_operands = 1 : i64, tpu.core_type = #tpu.core_type<tc>} {
    %c0 = arith.constant 0 : index
    %c0_0 = arith.constant 0 : index
    %0 = vector.load %arg0[%c0, %c0_0] : memref<16x32xf32, #tpu.memory_space<vmem>>, vector<16x32xf32>
    %c0_1 = arith.constant 0 : index
    %c0_2 = arith.constant 0 : index
    %1 = vector.load %arg1[%c0_1, %c0_2] : memref<32x192xf32, #tpu.memory_space<vmem>>, vector<32x192xf32>
    %cst = arith.constant dense<0.000000e+00> : vector<16x192xf32>
    %2 = tpu.matmul %0, %1, %cst {dimension_numbers = #tpu.dot_dimension_numbers<[1], [0], [0], [1], [0, 0, 1, 1], [], []>} : vector<16x32xf32>, vector<32x192xf32>, vector<16x192xf32> -> vector<16x192xf32>
    %c0_3 = arith.constant 0 : index
    %c0_4 = arith.constant 0 : index
    %3 = vector.load %arg3[%c0_3, %c0_4] : memref<1x192xf32, #tpu.memory_space<vmem>>, vector<1x192xf32>
    %4 = vector.broadcast %3 : vector<1x192xf32> to vector<16x192xf32>
    %5 = arith.addf %2, %4 : vector<16x192xf32>
    %6 = vector.shape_cast %5 : vector<16x192xf32> to vector<8x2x192xf32>
    %c0_5 = arith.constant 0 : index
    %c0_6 = arith.constant 0 : index
    %c0_7 = arith.constant 0 : index
    %7 = vector.load %arg10[%c0_5, %c0_6, %c0_7] : memref<8x2x192xf32, #tpu.memory_space<vmem>>, vector<8x2x192xf32>
    tpu.vector_store %arg10[%c0_5, %c0_6, %c0_7], %6 {strides = array<i32>} : memref<8x2x192xf32, #tpu.memory_space<vmem>>, vector<8x2x192xf32>,
    %c0_8 = arith.constant 0 : index
    %c0_9 = arith.constant 0 : index
    %8 = vector.load %arg2[%c0_8, %c0_9] : memref<64x96xf32, #tpu.memory_space<vmem>>, vector<64x96xf32>
    %c0_10 = arith.constant 0 : index
    %c0_11 = arith.constant 0 : index
    %9 = vector.load %arg4[%c0_10, %c0_11] : memref<1x96xf32, #tpu.memory_space<vmem>>, vector<1x96xf32>
    %10 = vector.shape_cast %9 : vector<1x96xf32> to vector<1x96xf32>
    %11 = vector.broadcast %10 : vector<1x96xf32> to vector<2x96xf32>
    %c0_12 = arith.constant 0 : index
    %c0_13 = arith.constant 0 : index
    %12 = vector.load %arg5[%c0_12, %c0_13] : memref<1x96xf32, #tpu.memory_space<vmem>>, vector<1x96xf32>
    %13 = vector.shape_cast %12 : vector<1x96xf32> to vector<1x96xf32>
    %14 = vector.broadcast %13 : vector<1x96xf32> to vector<2x96xf32>
    %15 = tpu.concatenate %11, %14 in 0 : vector<2x96xf32>, vector<2x96xf32> -> vector<4x96xf32>
    %cst_14 = arith.constant 0.000000e+00 : f32
    %16 = vector.broadcast %cst_14 : f32 to vector<2x32xf32>
    %cst_15 = arith.constant 0.000000e+00 : f32
    %17 = vector.broadcast %cst_15 : f32 to vector<2x32xf32>
    %c0_i32 = arith.constant 0 : i32
    %c7_i32 = arith.constant 7 : i32
    %18 = arith.subi %c7_i32, %c0_i32 : i32
    %19 = arith.index_cast %c0_i32 : i32 to index
    %c0_16 = arith.constant 0 : index
    %c0_17 = arith.constant 0 : index
    %20 = vector.load %arg10[%19, %c0_16, %c0_17] : memref<8x2x192xf32, #tpu.memory_space<vmem>>, vector<1x2x192xf32>
    %21 = vector.shape_cast %20 : vector<1x2x192xf32> to vector<2x192xf32>
    %22 = arith.index_cast %18 : i32 to index
    %c0_18 = arith.constant 0 : index
    %c0_19 = arith.constant 0 : index
    %23 = vector.load %arg10[%22, %c0_18, %c0_19] : memref<8x2x192xf32, #tpu.memory_space<vmem>>, vector<1x2x192xf32>
    %24 = vector.shape_cast %23 : vector<1x2x192xf32> to vector<2x192xf32>
    %25 = vector.extract_strided_slice %21 {offsets = [0, 0], sizes = [2, 96], strides = [1, 1]} : vector<2x192xf32> to vector<2x96xf32>
    %26 = vector.extract_strided_slice %24 {offsets = [0, 96], sizes = [2, 96], strides = [1, 1]} : vector<2x192xf32> to vector<2x96xf32>
    %27 = tpu.concatenate %25, %26 in 0 : vector<2x96xf32>, vector<2x96xf32> -> vector<4x96xf32>
    %28 = tpu.concatenate %17, %16 in 1 : vector<2x32xf32>, vector<2x32xf32> -> vector<2x64xf32>
    %29 = tpu.concatenate %16, %17 in 1 : vector<2x32xf32>, vector<2x32xf32> -> vector<2x64xf32>
    %30 = tpu.concatenate %28, %29 in 0 : vector<2x64xf32>, vector<2x64xf32> -> vector<4x64xf32>
    %cst_20 = arith.constant dense<0.000000e+00> : vector<4x96xf32>
    %31 = tpu.matmul %30, %8, %cst_20 {dimension_numbers = #tpu.dot_dimension_numbers<[1], [0], [0], [1], [0, 0, 1, 1], [], []>} : vector<4x64xf32>, vector<64x96xf32>, vector<4x96xf32> -> vector<4x96xf32>
    %32 = arith.addf %31, %15 : vector<4x96xf32>
    %33 = vector.extract_strided_slice %27 {offsets = [0, 0], sizes = [4, 32], strides = [1, 1]} : vector<4x96xf32> to vector<4x32xf32>
    %34 = vector.extract_strided_slice %32 {offsets = [0, 0], sizes = [4, 32], strides = [1, 1]} : vector<4x96xf32> to vector<4x32xf32>
    %35 = arith.addf %33, %34 : vector<4x32xf32>
    %36 = arith.negf %35 : vector<4x32xf32>
    %37 = math.exp %36 : vector<4x32xf32>
    %cst_21 = arith.constant 1.000000e+00 : f32
    %38 = vector.broadcast %cst_21 : f32 to vector<4x32xf32>
    %39 = arith.addf %38, %37 : vector<4x32xf32>
    %40 = arith.divf %38, %39 : vector<4x32xf32>
    %41 = vector.extract_strided_slice %27 {offsets = [0, 32], sizes = [4, 32], strides = [1, 1]} : vector<4x96xf32> to vector<4x32xf32>
    %42 = vector.extract_strided_slice %32 {offsets = [0, 32], sizes = [4, 32], strides = [1, 1]} : vector<4x96xf32> to vector<4x32xf32>
    %43 = arith.addf %41, %42 : vector<4x32xf32>
    %44 = arith.negf %43 : vector<4x32xf32>
    %45 = math.exp %44 : vector<4x32xf32>
    %cst_22 = arith.constant 1.000000e+00 : f32
    %46 = vector.broadcast %cst_22 : f32 to vector<4x32xf32>
    %47 = arith.addf %46, %45 : vector<4x32xf32>
    %48 = arith.divf %46, %47 : vector<4x32xf32>
    %49 = vector.extract_strided_slice %27 {offsets = [0, 64], sizes = [4, 32], strides = [1, 1]} : vector<4x96xf32> to vector<4x32xf32>
    %50 = vector.extract_strided_slice %32 {offsets = [0, 64], sizes = [4, 32], strides = [1, 1]} : vector<4x96xf32> to vector<4x32xf32>
    %51 = arith.mulf %40, %50 : vector<4x32xf32>
    %52 = arith.addf %49, %51 : vector<4x32xf32>
    %53 = math.tanh %52 : vector<4x32xf32>
    %54 = tpu.concatenate %17, %17 in 0 : vector<2x32xf32>, vector<2x32xf32> -> vector<4x32xf32>
    %cst_23 = arith.constant 1.000000e+00 : f32
    %55 = vector.broadcast %cst_23 : f32 to vector<4x32xf32>
    %56 = arith.subf %55, %48 : vector<4x32xf32>
    %57 = arith.mulf %56, %53 : vector<4x32xf32>
    %58 = arith.mulf %48, %54 : vector<4x32xf32>
    %59 = arith.addf %57, %58 : vector<4x32xf32>
    %60 = vector.extract_strided_slice %59 {offsets = [0, 0], sizes = [2, 32], strides = [1, 1]} : vector<4x32xf32> to vector<2x32xf32>
    %61 = vector.extract_strided_slice %59 {offsets = [2, 0], sizes = [2, 32], strides = [1, 1]} : vector<4x32xf32> to vector<2x32xf32>
    %62 = arith.index_cast %c0_i32 : i32 to index
    %c0_24 = arith.constant 0 : index
    %c0_25 = arith.constant 0 : index
    %63 = vector.load %arg8[%62, %c0_24, %c0_25] : memref<8x2x64xf32, #tpu.memory_space<vmem>>, vector<1x2x32xf32>
    %64 = vector.shape_cast %63 : vector<1x2x32xf32> to vector<2x32xf32>
    %65 = vector.shape_cast %60 : vector<2x32xf32> to vector<1x2x32xf32>
    tpu.vector_store %arg8[%62, %c0_24, %c0_25], %65 {strides = array<i32>} : memref<8x2x64xf32, #tpu.memory_space<vmem>>, vector<1x2x32xf32>,
    %66 = arith.index_cast %18 : i32 to index
    %c0_26 = arith.constant 0 : index
    %c32 = arith.constant 32 : index
    %67 = vector.load %arg8[%66, %c0_26, %c32] : memref<8x2x64xf32, #tpu.memory_space<vmem>>, vector<1x2x32xf32>
    %68 = vector.shape_cast %67 : vector<1x2x32xf32> to vector<2x32xf32>
    %69 = vector.shape_cast %61 : vector<2x32xf32> to vector<1x2x32xf32>
    tpu.vector_store %arg8[%66, %c0_26, %c32], %69 {strides = array<i32>} : memref<8x2x64xf32, #tpu.memory_space<vmem>>, vector<1x2x32xf32>,
    %c1_i32 = arith.constant 1 : i32
    %c7_i32_27 = arith.constant 7 : i32
    %70 = arith.subi %c7_i32_27, %c1_i32 : i32
    %71 = arith.index_cast %c1_i32 : i32 to index
    %c0_28 = arith.constant 0 : index
    %c0_29 = arith.constant 0 : index
    %72 = vector.load %arg10[%71, %c0_28, %c0_29] : memref<8x2x192xf32, #tpu.memory_space<vmem>>, vector<1x2x192xf32>
    %73 = vector.shape_cast %72 : vector<1x2x192xf32> to vector<2x192xf32>
    %74 = arith.index_cast %70 : i32 to index
    %c0_30 = arith.constant 0 : index
    %c0_31 = arith.constant 0 : index
    %75 = vector.load %arg10[%74, %c0_30, %c0_31] : memref<8x2x192xf32, #tpu.memory_space<vmem>>, vector<1x2x192xf32>
    %76 = vector.shape_cast %75 : vector<1x2x192xf32> to vector<2x192xf32>
    %77 = vector.extract_strided_slice %73 {offsets = [0, 0], sizes = [2, 96], strides = [1, 1]} : vector<2x192xf32> to vector<2x96xf32>
    %78 = vector.extract_strided_slice %76 {offsets = [0, 96], sizes = [2, 96], strides = [1, 1]} : vector<2x192xf32> to vector<2x96xf32>
    %79 = tpu.concatenate %77, %78 in 0 : vector<2x96xf32>, vector<2x96xf32> -> vector<4x96xf32>
    %80 = tpu.concatenate %60, %16 in 1 : vector<2x32xf32>, vector<2x32xf32> -> vector<2x64xf32>
    %81 = tpu.concatenate %16, %61 in 1 : vector<2x32xf32>, vector<2x32xf32> -> vector<2x64xf32>
    %82 = tpu.concatenate %80, %81 in 0 : vector<2x64xf32>, vector<2x64xf32> -> vector<4x64xf32>
    %cst_32 = arith.constant dense<0.000000e+00> : vector<4x96xf32>
    %83 = tpu.matmul %82, %8, %cst_32 {dimension_numbers = #tpu.dot_dimension_numbers<[1], [0], [0], [1], [0, 0, 1, 1], [], []>} : vector<4x64xf32>, vector<64x96xf32>, vector<4x96xf32> -> vector<4x96xf32>
    %84 = arith.addf %83, %15 : vector<4x96xf32>
    %85 = vector.extract_strided_slice %79 {offsets = [0, 0], sizes = [4, 32], strides = [1, 1]} : vector<4x96xf32> to vector<4x32xf32>
    %86 = vector.extract_strided_slice %84 {offsets = [0, 0], sizes = [4, 32], strides = [1, 1]} : vector<4x96xf32> to vector<4x32xf32>
    %87 = arith.addf %85, %86 : vector<4x32xf32>
    %88 = arith.negf %87 : vector<4x32xf32>
    %89 = math.exp %88 : vector<4x32xf32>
    %cst_33 = arith.constant 1.000000e+00 : f32
    %90 = vector.broadcast %cst_33 : f32 to vector<4x32xf32>
    %91 = arith.addf %90, %89 : vector<4x32xf32>
    %92 = arith.divf %90, %91 : vector<4x32xf32>
    %93 = vector.extract_strided_slice %79 {offsets = [0, 32], sizes = [4, 32], strides = [1, 1]} : vector<4x96xf32> to vector<4x32xf32>
    %94 = vector.extract_strided_slice %84 {offsets = [0, 32], sizes = [4, 32], strides = [1, 1]} : vector<4x96xf32> to vector<4x32xf32>
    %95 = arith.addf %93, %94 : vector<4x32xf32>
    %96 = arith.negf %95 : vector<4x32xf32>
    %97 = math.exp %96 : vector<4x32xf32>
    %cst_34 = arith.constant 1.000000e+00 : f32
    %98 = vector.broadcast %cst_34 : f32 to vector<4x32xf32>
    %99 = arith.addf %98, %97 : vector<4x32xf32>
    %100 = arith.divf %98, %99 : vector<4x32xf32>
    %101 = vector.extract_strided_slice %79 {offsets = [0, 64], sizes = [4, 32], strides = [1, 1]} : vector<4x96xf32> to vector<4x32xf32>
    %102 = vector.extract_strided_slice %84 {offsets = [0, 64], sizes = [4, 32], strides = [1, 1]} : vector<4x96xf32> to vector<4x32xf32>
    %103 = arith.mulf %92, %102 : vector<4x32xf32>
    %104 = arith.addf %101, %103 : vector<4x32xf32>
    %105 = math.tanh %104 : vector<4x32xf32>
    %106 = tpu.concatenate %60, %61 in 0 : vector<2x32xf32>, vector<2x32xf32> -> vector<4x32xf32>
    %cst_35 = arith.constant 1.000000e+00 : f32
    %107 = vector.broadcast %cst_35 : f32 to vector<4x32xf32>
    %108 = arith.subf %107, %100 : vector<4x32xf32>
    %109 = arith.mulf %108, %105 : vector<4x32xf32>
    %110 = arith.mulf %100, %106 : vector<4x32xf32>
    %111 = arith.addf %109, %110 : vector<4x32xf32>
    %112 = vector.extract_strided_slice %111 {offsets = [0, 0], sizes = [2, 32], strides = [1, 1]} : vector<4x32xf32> to vector<2x32xf32>
    %113 = vector.extract_strided_slice %111 {offsets = [2, 0], sizes = [2, 32], strides = [1, 1]} : vector<4x32xf32> to vector<2x32xf32>
    %114 = arith.index_cast %c1_i32 : i32 to index
    %c0_36 = arith.constant 0 : index
    %c0_37 = arith.constant 0 : index
    %115 = vector.load %arg8[%114, %c0_36, %c0_37] : memref<8x2x64xf32, #tpu.memory_space<vmem>>, vector<1x2x32xf32>
    %116 = vector.shape_cast %115 : vector<1x2x32xf32> to vector<2x32xf32>
    %117 = vector.shape_cast %112 : vector<2x32xf32> to vector<1x2x32xf32>
    tpu.vector_store %arg8[%114, %c0_36, %c0_37], %117 {strides = array<i32>} : memref<8x2x64xf32, #tpu.memory_space<vmem>>, vector<1x2x32xf32>,
    %118 = arith.index_cast %70 : i32 to index
    %c0_38 = arith.constant 0 : index
    %c32_39 = arith.constant 32 : index
    %119 = vector.load %arg8[%118, %c0_38, %c32_39] : memref<8x2x64xf32, #tpu.memory_space<vmem>>, vector<1x2x32xf32>
    %120 = vector.shape_cast %119 : vector<1x2x32xf32> to vector<2x32xf32>
    %121 = vector.shape_cast %113 : vector<2x32xf32> to vector<1x2x32xf32>
    tpu.vector_store %arg8[%118, %c0_38, %c32_39], %121 {strides = array<i32>} : memref<8x2x64xf32, #tpu.memory_space<vmem>>, vector<1x2x32xf32>,
    %c2_i32 = arith.constant 2 : i32
    %c7_i32_40 = arith.constant 7 : i32
    %122 = arith.subi %c7_i32_40, %c2_i32 : i32
    %123 = arith.index_cast %c2_i32 : i32 to index
    %c0_41 = arith.constant 0 : index
    %c0_42 = arith.constant 0 : index
    %124 = vector.load %arg10[%123, %c0_41, %c0_42] : memref<8x2x192xf32, #tpu.memory_space<vmem>>, vector<1x2x192xf32>
    %125 = vector.shape_cast %124 : vector<1x2x192xf32> to vector<2x192xf32>
    %126 = arith.index_cast %122 : i32 to index
    %c0_43 = arith.constant 0 : index
    %c0_44 = arith.constant 0 : index
    %127 = vector.load %arg10[%126, %c0_43, %c0_44] : memref<8x2x192xf32, #tpu.memory_space<vmem>>, vector<1x2x192xf32>
    %128 = vector.shape_cast %127 : vector<1x2x192xf32> to vector<2x192xf32>
    %129 = vector.extract_strided_slice %125 {offsets = [0, 0], sizes = [2, 96], strides = [1, 1]} : vector<2x192xf32> to vector<2x96xf32>
    %130 = vector.extract_strided_slice %128 {offsets = [0, 96], sizes = [2, 96], strides = [1, 1]} : vector<2x192xf32> to vector<2x96xf32>
    %131 = tpu.concatenate %129, %130 in 0 : vector<2x96xf32>, vector<2x96xf32> -> vector<4x96xf32>
    %132 = tpu.concatenate %112, %16 in 1 : vector<2x32xf32>, vector<2x32xf32> -> vector<2x64xf32>
    %133 = tpu.concatenate %16, %113 in 1 : vector<2x32xf32>, vector<2x32xf32> -> vector<2x64xf32>
    %134 = tpu.concatenate %132, %133 in 0 : vector<2x64xf32>, vector<2x64xf32> -> vector<4x64xf32>
    %cst_45 = arith.constant dense<0.000000e+00> : vector<4x96xf32>
    %135 = tpu.matmul %134, %8, %cst_45 {dimension_numbers = #tpu.dot_dimension_numbers<[1], [0], [0], [1], [0, 0, 1, 1], [], []>} : vector<4x64xf32>, vector<64x96xf32>, vector<4x96xf32> -> vector<4x96xf32>
    %136 = arith.addf %135, %15 : vector<4x96xf32>
    %137 = vector.extract_strided_slice %131 {offsets = [0, 0], sizes = [4, 32], strides = [1, 1]} : vector<4x96xf32> to vector<4x32xf32>
    %138 = vector.extract_strided_slice %136 {offsets = [0, 0], sizes = [4, 32], strides = [1, 1]} : vector<4x96xf32> to vector<4x32xf32>
    %139 = arith.addf %137, %138 : vector<4x32xf32>
    %140 = arith.negf %139 : vector<4x32xf32>
    %141 = math.exp %140 : vector<4x32xf32>
    %cst_46 = arith.constant 1.000000e+00 : f32
    %142 = vector.broadcast %cst_46 : f32 to vector<4x32xf32>
    %143 = arith.addf %142, %141 : vector<4x32xf32>
    %144 = arith.divf %142, %143 : vector<4x32xf32>
    %145 = vector.extract_strided_slice %131 {offsets = [0, 32], sizes = [4, 32], strides = [1, 1]} : vector<4x96xf32> to vector<4x32xf32>
    %146 = vector.extract_strided_slice %136 {offsets = [0, 32], sizes = [4, 32], strides = [1, 1]} : vector<4x96xf32> to vector<4x32xf32>
    %147 = arith.addf %145, %146 : vector<4x32xf32>
    %148 = arith.negf %147 : vector<4x32xf32>
    %149 = math.exp %148 : vector<4x32xf32>
    %cst_47 = arith.constant 1.000000e+00 : f32
    %150 = vector.broadcast %cst_47 : f32 to vector<4x32xf32>
    %151 = arith.addf %150, %149 : vector<4x32xf32>
    %152 = arith.divf %150, %151 : vector<4x32xf32>
    %153 = vector.extract_strided_slice %131 {offsets = [0, 64], sizes = [4, 32], strides = [1, 1]} : vector<4x96xf32> to vector<4x32xf32>
    %154 = vector.extract_strided_slice %136 {offsets = [0, 64], sizes = [4, 32], strides = [1, 1]} : vector<4x96xf32> to vector<4x32xf32>
    %155 = arith.mulf %144, %154 : vector<4x32xf32>
    %156 = arith.addf %153, %155 : vector<4x32xf32>
    %157 = math.tanh %156 : vector<4x32xf32>
    %158 = tpu.concatenate %112, %113 in 0 : vector<2x32xf32>, vector<2x32xf32> -> vector<4x32xf32>
    %cst_48 = arith.constant 1.000000e+00 : f32
    %159 = vector.broadcast %cst_48 : f32 to vector<4x32xf32>
    %160 = arith.subf %159, %152 : vector<4x32xf32>
    %161 = arith.mulf %160, %157 : vector<4x32xf32>
    %162 = arith.mulf %152, %158 : vector<4x32xf32>
    %163 = arith.addf %161, %162 : vector<4x32xf32>
    %164 = vector.extract_strided_slice %163 {offsets = [0, 0], sizes = [2, 32], strides = [1, 1]} : vector<4x32xf32> to vector<2x32xf32>
    %165 = vector.extract_strided_slice %163 {offsets = [2, 0], sizes = [2, 32], strides = [1, 1]} : vector<4x32xf32> to vector<2x32xf32>
    %166 = arith.index_cast %c2_i32 : i32 to index
    %c0_49 = arith.constant 0 : index
    %c0_50 = arith.constant 0 : index
    %167 = vector.load %arg8[%166, %c0_49, %c0_50] : memref<8x2x64xf32, #tpu.memory_space<vmem>>, vector<1x2x32xf32>
    %168 = vector.shape_cast %167 : vector<1x2x32xf32> to vector<2x32xf32>
    %169 = vector.shape_cast %164 : vector<2x32xf32> to vector<1x2x32xf32>
    tpu.vector_store %arg8[%166, %c0_49, %c0_50], %169 {strides = array<i32>} : memref<8x2x64xf32, #tpu.memory_space<vmem>>, vector<1x2x32xf32>,
    %170 = arith.index_cast %122 : i32 to index
    %c0_51 = arith.constant 0 : index
    %c32_52 = arith.constant 32 : index
    %171 = vector.load %arg8[%170, %c0_51, %c32_52] : memref<8x2x64xf32, #tpu.memory_space<vmem>>, vector<1x2x32xf32>
    %172 = vector.shape_cast %171 : vector<1x2x32xf32> to vector<2x32xf32>
    %173 = vector.shape_cast %165 : vector<2x32xf32> to vector<1x2x32xf32>
    tpu.vector_store %arg8[%170, %c0_51, %c32_52], %173 {strides = array<i32>} : memref<8x2x64xf32, #tpu.memory_space<vmem>>, vector<1x2x32xf32>,
    %c3_i32 = arith.constant 3 : i32
    %c7_i32_53 = arith.constant 7 : i32
    %174 = arith.subi %c7_i32_53, %c3_i32 : i32
    %175 = arith.index_cast %c3_i32 : i32 to index
    %c0_54 = arith.constant 0 : index
    %c0_55 = arith.constant 0 : index
    %176 = vector.load %arg10[%175, %c0_54, %c0_55] : memref<8x2x192xf32, #tpu.memory_space<vmem>>, vector<1x2x192xf32>
    %177 = vector.shape_cast %176 : vector<1x2x192xf32> to vector<2x192xf32>
    %178 = arith.index_cast %174 : i32 to index
    %c0_56 = arith.constant 0 : index
    %c0_57 = arith.constant 0 : index
    %179 = vector.load %arg10[%178, %c0_56, %c0_57] : memref<8x2x192xf32, #tpu.memory_space<vmem>>, vector<1x2x192xf32>
    %180 = vector.shape_cast %179 : vector<1x2x192xf32> to vector<2x192xf32>
    %181 = vector.extract_strided_slice %177 {offsets = [0, 0], sizes = [2, 96], strides = [1, 1]} : vector<2x192xf32> to vector<2x96xf32>
    %182 = vector.extract_strided_slice %180 {offsets = [0, 96], sizes = [2, 96], strides = [1, 1]} : vector<2x192xf32> to vector<2x96xf32>
    %183 = tpu.concatenate %181, %182 in 0 : vector<2x96xf32>, vector<2x96xf32> -> vector<4x96xf32>
    %184 = tpu.concatenate %164, %16 in 1 : vector<2x32xf32>, vector<2x32xf32> -> vector<2x64xf32>
    %185 = tpu.concatenate %16, %165 in 1 : vector<2x32xf32>, vector<2x32xf32> -> vector<2x64xf32>
    %186 = tpu.concatenate %184, %185 in 0 : vector<2x64xf32>, vector<2x64xf32> -> vector<4x64xf32>
    %cst_58 = arith.constant dense<0.000000e+00> : vector<4x96xf32>
    %187 = tpu.matmul %186, %8, %cst_58 {dimension_numbers = #tpu.dot_dimension_numbers<[1], [0], [0], [1], [0, 0, 1, 1], [], []>} : vector<4x64xf32>, vector<64x96xf32>, vector<4x96xf32> -> vector<4x96xf32>
    %188 = arith.addf %187, %15 : vector<4x96xf32>
    %189 = vector.extract_strided_slice %183 {offsets = [0, 0], sizes = [4, 32], strides = [1, 1]} : vector<4x96xf32> to vector<4x32xf32>
    %190 = vector.extract_strided_slice %188 {offsets = [0, 0], sizes = [4, 32], strides = [1, 1]} : vector<4x96xf32> to vector<4x32xf32>
    %191 = arith.addf %189, %190 : vector<4x32xf32>
    %192 = arith.negf %191 : vector<4x32xf32>
    %193 = math.exp %192 : vector<4x32xf32>
    %cst_59 = arith.constant 1.000000e+00 : f32
    %194 = vector.broadcast %cst_59 : f32 to vector<4x32xf32>
    %195 = arith.addf %194, %193 : vector<4x32xf32>
    %196 = arith.divf %194, %195 : vector<4x32xf32>
    %197 = vector.extract_strided_slice %183 {offsets = [0, 32], sizes = [4, 32], strides = [1, 1]} : vector<4x96xf32> to vector<4x32xf32>
    %198 = vector.extract_strided_slice %188 {offsets = [0, 32], sizes = [4, 32], strides = [1, 1]} : vector<4x96xf32> to vector<4x32xf32>
    %199 = arith.addf %197, %198 : vector<4x32xf32>
    %200 = arith.negf %199 : vector<4x32xf32>
    %201 = math.exp %200 : vector<4x32xf32>
    %cst_60 = arith.constant 1.000000e+00 : f32
    %202 = vector.broadcast %cst_60 : f32 to vector<4x32xf32>
    %203 = arith.addf %202, %201 : vector<4x32xf32>
    %204 = arith.divf %202, %203 : vector<4x32xf32>
    %205 = vector.extract_strided_slice %183 {offsets = [0, 64], sizes = [4, 32], strides = [1, 1]} : vector<4x96xf32> to vector<4x32xf32>
    %206 = vector.extract_strided_slice %188 {offsets = [0, 64], sizes = [4, 32], strides = [1, 1]} : vector<4x96xf32> to vector<4x32xf32>
    %207 = arith.mulf %196, %206 : vector<4x32xf32>
    %208 = arith.addf %205, %207 : vector<4x32xf32>
    %209 = math.tanh %208 : vector<4x32xf32>
    %210 = tpu.concatenate %164, %165 in 0 : vector<2x32xf32>, vector<2x32xf32> -> vector<4x32xf32>
    %cst_61 = arith.constant 1.000000e+00 : f32
    %211 = vector.broadcast %cst_61 : f32 to vector<4x32xf32>
    %212 = arith.subf %211, %204 : vector<4x32xf32>
    %213 = arith.mulf %212, %209 : vector<4x32xf32>
    %214 = arith.mulf %204, %210 : vector<4x32xf32>
    %215 = arith.addf %213, %214 : vector<4x32xf32>
    %216 = vector.extract_strided_slice %215 {offsets = [0, 0], sizes = [2, 32], strides = [1, 1]} : vector<4x32xf32> to vector<2x32xf32>
    %217 = vector.extract_strided_slice %215 {offsets = [2, 0], sizes = [2, 32], strides = [1, 1]} : vector<4x32xf32> to vector<2x32xf32>
    %218 = arith.index_cast %c3_i32 : i32 to index
    %c0_62 = arith.constant 0 : index
    %c0_63 = arith.constant 0 : index
    %219 = vector.load %arg8[%218, %c0_62, %c0_63] : memref<8x2x64xf32, #tpu.memory_space<vmem>>, vector<1x2x32xf32>
    %220 = vector.shape_cast %219 : vector<1x2x32xf32> to vector<2x32xf32>
    %221 = vector.shape_cast %216 : vector<2x32xf32> to vector<1x2x32xf32>
    tpu.vector_store %arg8[%218, %c0_62, %c0_63], %221 {strides = array<i32>} : memref<8x2x64xf32, #tpu.memory_space<vmem>>, vector<1x2x32xf32>,
    %222 = arith.index_cast %174 : i32 to index
    %c0_64 = arith.constant 0 : index
    %c32_65 = arith.constant 32 : index
    %223 = vector.load %arg8[%222, %c0_64, %c32_65] : memref<8x2x64xf32, #tpu.memory_space<vmem>>, vector<1x2x32xf32>
    %224 = vector.shape_cast %223 : vector<1x2x32xf32> to vector<2x32xf32>
    %225 = vector.shape_cast %217 : vector<2x32xf32> to vector<1x2x32xf32>
    tpu.vector_store %arg8[%222, %c0_64, %c32_65], %225 {strides = array<i32>} : memref<8x2x64xf32, #tpu.memory_space<vmem>>, vector<1x2x32xf32>,
    %c4_i32 = arith.constant 4 : i32
    %c7_i32_66 = arith.constant 7 : i32
    %226 = arith.subi %c7_i32_66, %c4_i32 : i32
    %227 = arith.index_cast %c4_i32 : i32 to index
    %c0_67 = arith.constant 0 : index
    %c0_68 = arith.constant 0 : index
    %228 = vector.load %arg10[%227, %c0_67, %c0_68] : memref<8x2x192xf32, #tpu.memory_space<vmem>>, vector<1x2x192xf32>
    %229 = vector.shape_cast %228 : vector<1x2x192xf32> to vector<2x192xf32>
    %230 = arith.index_cast %226 : i32 to index
    %c0_69 = arith.constant 0 : index
    %c0_70 = arith.constant 0 : index
    %231 = vector.load %arg10[%230, %c0_69, %c0_70] : memref<8x2x192xf32, #tpu.memory_space<vmem>>, vector<1x2x192xf32>
    %232 = vector.shape_cast %231 : vector<1x2x192xf32> to vector<2x192xf32>
    %233 = vector.extract_strided_slice %229 {offsets = [0, 0], sizes = [2, 96], strides = [1, 1]} : vector<2x192xf32> to vector<2x96xf32>
    %234 = vector.extract_strided_slice %232 {offsets = [0, 96], sizes = [2, 96], strides = [1, 1]} : vector<2x192xf32> to vector<2x96xf32>
    %235 = tpu.concatenate %233, %234 in 0 : vector<2x96xf32>, vector<2x96xf32> -> vector<4x96xf32>
    %236 = tpu.concatenate %216, %16 in 1 : vector<2x32xf32>, vector<2x32xf32> -> vector<2x64xf32>
    %237 = tpu.concatenate %16, %217 in 1 : vector<2x32xf32>, vector<2x32xf32> -> vector<2x64xf32>
    %238 = tpu.concatenate %236, %237 in 0 : vector<2x64xf32>, vector<2x64xf32> -> vector<4x64xf32>
    %cst_71 = arith.constant dense<0.000000e+00> : vector<4x96xf32>
    %239 = tpu.matmul %238, %8, %cst_71 {dimension_numbers = #tpu.dot_dimension_numbers<[1], [0], [0], [1], [0, 0, 1, 1], [], []>} : vector<4x64xf32>, vector<64x96xf32>, vector<4x96xf32> -> vector<4x96xf32>
    %240 = arith.addf %239, %15 : vector<4x96xf32>
    %241 = vector.extract_strided_slice %235 {offsets = [0, 0], sizes = [4, 32], strides = [1, 1]} : vector<4x96xf32> to vector<4x32xf32>
    %242 = vector.extract_strided_slice %240 {offsets = [0, 0], sizes = [4, 32], strides = [1, 1]} : vector<4x96xf32> to vector<4x32xf32>
    %243 = arith.addf %241, %242 : vector<4x32xf32>
    %244 = arith.negf %243 : vector<4x32xf32>
    %245 = math.exp %244 : vector<4x32xf32>
    %cst_72 = arith.constant 1.000000e+00 : f32
    %246 = vector.broadcast %cst_72 : f32 to vector<4x32xf32>
    %247 = arith.addf %246, %245 : vector<4x32xf32>
    %248 = arith.divf %246, %247 : vector<4x32xf32>
    %249 = vector.extract_strided_slice %235 {offsets = [0, 32], sizes = [4, 32], strides = [1, 1]} : vector<4x96xf32> to vector<4x32xf32>
    %250 = vector.extract_strided_slice %240 {offsets = [0, 32], sizes = [4, 32], strides = [1, 1]} : vector<4x96xf32> to vector<4x32xf32>
    %251 = arith.addf %249, %250 : vector<4x32xf32>
    %252 = arith.negf %251 : vector<4x32xf32>
    %253 = math.exp %252 : vector<4x32xf32>
    %cst_73 = arith.constant 1.000000e+00 : f32
    %254 = vector.broadcast %cst_73 : f32 to vector<4x32xf32>
    %255 = arith.addf %254, %253 : vector<4x32xf32>
    %256 = arith.divf %254, %255 : vector<4x32xf32>
    %257 = vector.extract_strided_slice %235 {offsets = [0, 64], sizes = [4, 32], strides = [1, 1]} : vector<4x96xf32> to vector<4x32xf32>
    %258 = vector.extract_strided_slice %240 {offsets = [0, 64], sizes = [4, 32], strides = [1, 1]} : vector<4x96xf32> to vector<4x32xf32>
    %259 = arith.mulf %248, %258 : vector<4x32xf32>
    %260 = arith.addf %257, %259 : vector<4x32xf32>
    %261 = math.tanh %260 : vector<4x32xf32>
    %262 = tpu.concatenate %216, %217 in 0 : vector<2x32xf32>, vector<2x32xf32> -> vector<4x32xf32>
    %cst_74 = arith.constant 1.000000e+00 : f32
    %263 = vector.broadcast %cst_74 : f32 to vector<4x32xf32>
    %264 = arith.subf %263, %256 : vector<4x32xf32>
    %265 = arith.mulf %264, %261 : vector<4x32xf32>
    %266 = arith.mulf %256, %262 : vector<4x32xf32>
    %267 = arith.addf %265, %266 : vector<4x32xf32>
    %268 = vector.extract_strided_slice %267 {offsets = [0, 0], sizes = [2, 32], strides = [1, 1]} : vector<4x32xf32> to vector<2x32xf32>
    %269 = vector.extract_strided_slice %267 {offsets = [2, 0], sizes = [2, 32], strides = [1, 1]} : vector<4x32xf32> to vector<2x32xf32>
    %270 = arith.index_cast %c4_i32 : i32 to index
    %c0_75 = arith.constant 0 : index
    %c0_76 = arith.constant 0 : index
    %271 = vector.load %arg8[%270, %c0_75, %c0_76] : memref<8x2x64xf32, #tpu.memory_space<vmem>>, vector<1x2x32xf32>
    %272 = vector.shape_cast %271 : vector<1x2x32xf32> to vector<2x32xf32>
    %273 = vector.shape_cast %268 : vector<2x32xf32> to vector<1x2x32xf32>
    tpu.vector_store %arg8[%270, %c0_75, %c0_76], %273 {strides = array<i32>} : memref<8x2x64xf32, #tpu.memory_space<vmem>>, vector<1x2x32xf32>,
    %274 = arith.index_cast %226 : i32 to index
    %c0_77 = arith.constant 0 : index
    %c32_78 = arith.constant 32 : index
    %275 = vector.load %arg8[%274, %c0_77, %c32_78] : memref<8x2x64xf32, #tpu.memory_space<vmem>>, vector<1x2x32xf32>
    %276 = vector.shape_cast %275 : vector<1x2x32xf32> to vector<2x32xf32>
    %277 = vector.shape_cast %269 : vector<2x32xf32> to vector<1x2x32xf32>
    tpu.vector_store %arg8[%274, %c0_77, %c32_78], %277 {strides = array<i32>} : memref<8x2x64xf32, #tpu.memory_space<vmem>>, vector<1x2x32xf32>,
    %c5_i32 = arith.constant 5 : i32
    %c7_i32_79 = arith.constant 7 : i32
    %278 = arith.subi %c7_i32_79, %c5_i32 : i32
    %279 = arith.index_cast %c5_i32 : i32 to index
    %c0_80 = arith.constant 0 : index
    %c0_81 = arith.constant 0 : index
    %280 = vector.load %arg10[%279, %c0_80, %c0_81] : memref<8x2x192xf32, #tpu.memory_space<vmem>>, vector<1x2x192xf32>
    %281 = vector.shape_cast %280 : vector<1x2x192xf32> to vector<2x192xf32>
    %282 = arith.index_cast %278 : i32 to index
    %c0_82 = arith.constant 0 : index
    %c0_83 = arith.constant 0 : index
    %283 = vector.load %arg10[%282, %c0_82, %c0_83] : memref<8x2x192xf32, #tpu.memory_space<vmem>>, vector<1x2x192xf32>
    %284 = vector.shape_cast %283 : vector<1x2x192xf32> to vector<2x192xf32>
    %285 = vector.extract_strided_slice %281 {offsets = [0, 0], sizes = [2, 96], strides = [1, 1]} : vector<2x192xf32> to vector<2x96xf32>
    %286 = vector.extract_strided_slice %284 {offsets = [0, 96], sizes = [2, 96], strides = [1, 1]} : vector<2x192xf32> to vector<2x96xf32>
    %287 = tpu.concatenate %285, %286 in 0 : vector<2x96xf32>, vector<2x96xf32> -> vector<4x96xf32>
    %288 = tpu.concatenate %268, %16 in 1 : vector<2x32xf32>, vector<2x32xf32> -> vector<2x64xf32>
    %289 = tpu.concatenate %16, %269 in 1 : vector<2x32xf32>, vector<2x32xf32> -> vector<2x64xf32>
    %290 = tpu.concatenate %288, %289 in 0 : vector<2x64xf32>, vector<2x64xf32> -> vector<4x64xf32>
    %cst_84 = arith.constant dense<0.000000e+00> : vector<4x96xf32>
    %291 = tpu.matmul %290, %8, %cst_84 {dimension_numbers = #tpu.dot_dimension_numbers<[1], [0], [0], [1], [0, 0, 1, 1], [], []>} : vector<4x64xf32>, vector<64x96xf32>, vector<4x96xf32> -> vector<4x96xf32>
    %292 = arith.addf %291, %15 : vector<4x96xf32>
    %293 = vector.extract_strided_slice %287 {offsets = [0, 0], sizes = [4, 32], strides = [1, 1]} : vector<4x96xf32> to vector<4x32xf32>
    %294 = vector.extract_strided_slice %292 {offsets = [0, 0], sizes = [4, 32], strides = [1, 1]} : vector<4x96xf32> to vector<4x32xf32>
    %295 = arith.addf %293, %294 : vector<4x32xf32>
    %296 = arith.negf %295 : vector<4x32xf32>
    %297 = math.exp %296 : vector<4x32xf32>
    %cst_85 = arith.constant 1.000000e+00 : f32
    %298 = vector.broadcast %cst_85 : f32 to vector<4x32xf32>
    %299 = arith.addf %298, %297 : vector<4x32xf32>
    %300 = arith.divf %298, %299 : vector<4x32xf32>
    %301 = vector.extract_strided_slice %287 {offsets = [0, 32], sizes = [4, 32], strides = [1, 1]} : vector<4x96xf32> to vector<4x32xf32>
    %302 = vector.extract_strided_slice %292 {offsets = [0, 32], sizes = [4, 32], strides = [1, 1]} : vector<4x96xf32> to vector<4x32xf32>
    %303 = arith.addf %301, %302 : vector<4x32xf32>
    %304 = arith.negf %303 : vector<4x32xf32>
    %305 = math.exp %304 : vector<4x32xf32>
    %cst_86 = arith.constant 1.000000e+00 : f32
    %306 = vector.broadcast %cst_86 : f32 to vector<4x32xf32>
    %307 = arith.addf %306, %305 : vector<4x32xf32>
    %308 = arith.divf %306, %307 : vector<4x32xf32>
    %309 = vector.extract_strided_slice %287 {offsets = [0, 64], sizes = [4, 32], strides = [1, 1]} : vector<4x96xf32> to vector<4x32xf32>
    %310 = vector.extract_strided_slice %292 {offsets = [0, 64], sizes = [4, 32], strides = [1, 1]} : vector<4x96xf32> to vector<4x32xf32>
    %311 = arith.mulf %300, %310 : vector<4x32xf32>
    %312 = arith.addf %309, %311 : vector<4x32xf32>
    %313 = math.tanh %312 : vector<4x32xf32>
    %314 = tpu.concatenate %268, %269 in 0 : vector<2x32xf32>, vector<2x32xf32> -> vector<4x32xf32>
    %cst_87 = arith.constant 1.000000e+00 : f32
    %315 = vector.broadcast %cst_87 : f32 to vector<4x32xf32>
    %316 = arith.subf %315, %308 : vector<4x32xf32>
    %317 = arith.mulf %316, %313 : vector<4x32xf32>
    %318 = arith.mulf %308, %314 : vector<4x32xf32>
    %319 = arith.addf %317, %318 : vector<4x32xf32>
    %320 = vector.extract_strided_slice %319 {offsets = [0, 0], sizes = [2, 32], strides = [1, 1]} : vector<4x32xf32> to vector<2x32xf32>
    %321 = vector.extract_strided_slice %319 {offsets = [2, 0], sizes = [2, 32], strides = [1, 1]} : vector<4x32xf32> to vector<2x32xf32>
    %322 = arith.index_cast %c5_i32 : i32 to index
    %c0_88 = arith.constant 0 : index
    %c0_89 = arith.constant 0 : index
    %323 = vector.load %arg8[%322, %c0_88, %c0_89] : memref<8x2x64xf32, #tpu.memory_space<vmem>>, vector<1x2x32xf32>
    %324 = vector.shape_cast %323 : vector<1x2x32xf32> to vector<2x32xf32>
    %325 = vector.shape_cast %320 : vector<2x32xf32> to vector<1x2x32xf32>
    tpu.vector_store %arg8[%322, %c0_88, %c0_89], %325 {strides = array<i32>} : memref<8x2x64xf32, #tpu.memory_space<vmem>>, vector<1x2x32xf32>,
    %326 = arith.index_cast %278 : i32 to index
    %c0_90 = arith.constant 0 : index
    %c32_91 = arith.constant 32 : index
    %327 = vector.load %arg8[%326, %c0_90, %c32_91] : memref<8x2x64xf32, #tpu.memory_space<vmem>>, vector<1x2x32xf32>
    %328 = vector.shape_cast %327 : vector<1x2x32xf32> to vector<2x32xf32>
    %329 = vector.shape_cast %321 : vector<2x32xf32> to vector<1x2x32xf32>
    tpu.vector_store %arg8[%326, %c0_90, %c32_91], %329 {strides = array<i32>} : memref<8x2x64xf32, #tpu.memory_space<vmem>>, vector<1x2x32xf32>,
    %c6_i32 = arith.constant 6 : i32
    %c7_i32_92 = arith.constant 7 : i32
    %330 = arith.subi %c7_i32_92, %c6_i32 : i32
    %331 = arith.index_cast %c6_i32 : i32 to index
    %c0_93 = arith.constant 0 : index
    %c0_94 = arith.constant 0 : index
    %332 = vector.load %arg10[%331, %c0_93, %c0_94] : memref<8x2x192xf32, #tpu.memory_space<vmem>>, vector<1x2x192xf32>
    %333 = vector.shape_cast %332 : vector<1x2x192xf32> to vector<2x192xf32>
    %334 = arith.index_cast %330 : i32 to index
    %c0_95 = arith.constant 0 : index
    %c0_96 = arith.constant 0 : index
    %335 = vector.load %arg10[%334, %c0_95, %c0_96] : memref<8x2x192xf32, #tpu.memory_space<vmem>>, vector<1x2x192xf32>
    %336 = vector.shape_cast %335 : vector<1x2x192xf32> to vector<2x192xf32>
    %337 = vector.extract_strided_slice %333 {offsets = [0, 0], sizes = [2, 96], strides = [1, 1]} : vector<2x192xf32> to vector<2x96xf32>
    %338 = vector.extract_strided_slice %336 {offsets = [0, 96], sizes = [2, 96], strides = [1, 1]} : vector<2x192xf32> to vector<2x96xf32>
    %339 = tpu.concatenate %337, %338 in 0 : vector<2x96xf32>, vector<2x96xf32> -> vector<4x96xf32>
    %340 = tpu.concatenate %320, %16 in 1 : vector<2x32xf32>, vector<2x32xf32> -> vector<2x64xf32>
    %341 = tpu.concatenate %16, %321 in 1 : vector<2x32xf32>, vector<2x32xf32> -> vector<2x64xf32>
    %342 = tpu.concatenate %340, %341 in 0 : vector<2x64xf32>, vector<2x64xf32> -> vector<4x64xf32>
    %cst_97 = arith.constant dense<0.000000e+00> : vector<4x96xf32>
    %343 = tpu.matmul %342, %8, %cst_97 {dimension_numbers = #tpu.dot_dimension_numbers<[1], [0], [0], [1], [0, 0, 1, 1], [], []>} : vector<4x64xf32>, vector<64x96xf32>, vector<4x96xf32> -> vector<4x96xf32>
    %344 = arith.addf %343, %15 : vector<4x96xf32>
    %345 = vector.extract_strided_slice %339 {offsets = [0, 0], sizes = [4, 32], strides = [1, 1]} : vector<4x96xf32> to vector<4x32xf32>
    %346 = vector.extract_strided_slice %344 {offsets = [0, 0], sizes = [4, 32], strides = [1, 1]} : vector<4x96xf32> to vector<4x32xf32>
    %347 = arith.addf %345, %346 : vector<4x32xf32>
    %348 = arith.negf %347 : vector<4x32xf32>
    %349 = math.exp %348 : vector<4x32xf32>
    %cst_98 = arith.constant 1.000000e+00 : f32
    %350 = vector.broadcast %cst_98 : f32 to vector<4x32xf32>
    %351 = arith.addf %350, %349 : vector<4x32xf32>
    %352 = arith.divf %350, %351 : vector<4x32xf32>
    %353 = vector.extract_strided_slice %339 {offsets = [0, 32], sizes = [4, 32], strides = [1, 1]} : vector<4x96xf32> to vector<4x32xf32>
    %354 = vector.extract_strided_slice %344 {offsets = [0, 32], sizes = [4, 32], strides = [1, 1]} : vector<4x96xf32> to vector<4x32xf32>
    %355 = arith.addf %353, %354 : vector<4x32xf32>
    %356 = arith.negf %355 : vector<4x32xf32>
    %357 = math.exp %356 : vector<4x32xf32>
    %cst_99 = arith.constant 1.000000e+00 : f32
    %358 = vector.broadcast %cst_99 : f32 to vector<4x32xf32>
    %359 = arith.addf %358, %357 : vector<4x32xf32>
    %360 = arith.divf %358, %359 : vector<4x32xf32>
    %361 = vector.extract_strided_slice %339 {offsets = [0, 64], sizes = [4, 32], strides = [1, 1]} : vector<4x96xf32> to vector<4x32xf32>
    %362 = vector.extract_strided_slice %344 {offsets = [0, 64], sizes = [4, 32], strides = [1, 1]} : vector<4x96xf32> to vector<4x32xf32>
    %363 = arith.mulf %352, %362 : vector<4x32xf32>
    %364 = arith.addf %361, %363 : vector<4x32xf32>
    %365 = math.tanh %364 : vector<4x32xf32>
    %366 = tpu.concatenate %320, %321 in 0 : vector<2x32xf32>, vector<2x32xf32> -> vector<4x32xf32>
    %cst_100 = arith.constant 1.000000e+00 : f32
    %367 = vector.broadcast %cst_100 : f32 to vector<4x32xf32>
    %368 = arith.subf %367, %360 : vector<4x32xf32>
    %369 = arith.mulf %368, %365 : vector<4x32xf32>
    %370 = arith.mulf %360, %366 : vector<4x32xf32>
    %371 = arith.addf %369, %370 : vector<4x32xf32>
    %372 = vector.extract_strided_slice %371 {offsets = [0, 0], sizes = [2, 32], strides = [1, 1]} : vector<4x32xf32> to vector<2x32xf32>
    %373 = vector.extract_strided_slice %371 {offsets = [2, 0], sizes = [2, 32], strides = [1, 1]} : vector<4x32xf32> to vector<2x32xf32>
    %374 = arith.index_cast %c6_i32 : i32 to index
    %c0_101 = arith.constant 0 : index
    %c0_102 = arith.constant 0 : index
    %375 = vector.load %arg8[%374, %c0_101, %c0_102] : memref<8x2x64xf32, #tpu.memory_space<vmem>>, vector<1x2x32xf32>
    %376 = vector.shape_cast %375 : vector<1x2x32xf32> to vector<2x32xf32>
    %377 = vector.shape_cast %372 : vector<2x32xf32> to vector<1x2x32xf32>
    tpu.vector_store %arg8[%374, %c0_101, %c0_102], %377 {strides = array<i32>} : memref<8x2x64xf32, #tpu.memory_space<vmem>>, vector<1x2x32xf32>,
    %378 = arith.index_cast %330 : i32 to index
    %c0_103 = arith.constant 0 : index
    %c32_104 = arith.constant 32 : index
    %379 = vector.load %arg8[%378, %c0_103, %c32_104] : memref<8x2x64xf32, #tpu.memory_space<vmem>>, vector<1x2x32xf32>
    %380 = vector.shape_cast %379 : vector<1x2x32xf32> to vector<2x32xf32>
    %381 = vector.shape_cast %373 : vector<2x32xf32> to vector<1x2x32xf32>
    tpu.vector_store %arg8[%378, %c0_103, %c32_104], %381 {strides = array<i32>} : memref<8x2x64xf32, #tpu.memory_space<vmem>>, vector<1x2x32xf32>,
    %c7_i32_105 = arith.constant 7 : i32
    %c7_i32_106 = arith.constant 7 : i32
    %382 = arith.subi %c7_i32_106, %c7_i32_105 : i32
    %383 = arith.index_cast %c7_i32_105 : i32 to index
    %c0_107 = arith.constant 0 : index
    %c0_108 = arith.constant 0 : index
    %384 = vector.load %arg10[%383, %c0_107, %c0_108] : memref<8x2x192xf32, #tpu.memory_space<vmem>>, vector<1x2x192xf32>
    %385 = vector.shape_cast %384 : vector<1x2x192xf32> to vector<2x192xf32>
    %386 = arith.index_cast %382 : i32 to index
    %c0_109 = arith.constant 0 : index
    %c0_110 = arith.constant 0 : index
    %387 = vector.load %arg10[%386, %c0_109, %c0_110] : memref<8x2x192xf32, #tpu.memory_space<vmem>>, vector<1x2x192xf32>
    %388 = vector.shape_cast %387 : vector<1x2x192xf32> to vector<2x192xf32>
    %389 = vector.extract_strided_slice %385 {offsets = [0, 0], sizes = [2, 96], strides = [1, 1]} : vector<2x192xf32> to vector<2x96xf32>
    %390 = vector.extract_strided_slice %388 {offsets = [0, 96], sizes = [2, 96], strides = [1, 1]} : vector<2x192xf32> to vector<2x96xf32>
    %391 = tpu.concatenate %389, %390 in 0 : vector<2x96xf32>, vector<2x96xf32> -> vector<4x96xf32>
    %392 = tpu.concatenate %372, %16 in 1 : vector<2x32xf32>, vector<2x32xf32> -> vector<2x64xf32>
    %393 = tpu.concatenate %16, %373 in 1 : vector<2x32xf32>, vector<2x32xf32> -> vector<2x64xf32>
    %394 = tpu.concatenate %392, %393 in 0 : vector<2x64xf32>, vector<2x64xf32> -> vector<4x64xf32>
    %cst_111 = arith.constant dense<0.000000e+00> : vector<4x96xf32>
    %395 = tpu.matmul %394, %8, %cst_111 {dimension_numbers = #tpu.dot_dimension_numbers<[1], [0], [0], [1], [0, 0, 1, 1], [], []>} : vector<4x64xf32>, vector<64x96xf32>, vector<4x96xf32> -> vector<4x96xf32>
    %396 = arith.addf %395, %15 : vector<4x96xf32>
    %397 = vector.extract_strided_slice %391 {offsets = [0, 0], sizes = [4, 32], strides = [1, 1]} : vector<4x96xf32> to vector<4x32xf32>
    %398 = vector.extract_strided_slice %396 {offsets = [0, 0], sizes = [4, 32], strides = [1, 1]} : vector<4x96xf32> to vector<4x32xf32>
    %399 = arith.addf %397, %398 : vector<4x32xf32>
    %400 = arith.negf %399 : vector<4x32xf32>
    %401 = math.exp %400 : vector<4x32xf32>
    %cst_112 = arith.constant 1.000000e+00 : f32
    %402 = vector.broadcast %cst_112 : f32 to vector<4x32xf32>
    %403 = arith.addf %402, %401 : vector<4x32xf32>
    %404 = arith.divf %402, %403 : vector<4x32xf32>
    %405 = vector.extract_strided_slice %391 {offsets = [0, 32], sizes = [4, 32], strides = [1, 1]} : vector<4x96xf32> to vector<4x32xf32>
    %406 = vector.extract_strided_slice %396 {offsets = [0, 32], sizes = [4, 32], strides = [1, 1]} : vector<4x96xf32> to vector<4x32xf32>
    %407 = arith.addf %405, %406 : vector<4x32xf32>
    %408 = arith.negf %407 : vector<4x32xf32>
    %409 = math.exp %408 : vector<4x32xf32>
    %cst_113 = arith.constant 1.000000e+00 : f32
    %410 = vector.broadcast %cst_113 : f32 to vector<4x32xf32>
    %411 = arith.addf %410, %409 : vector<4x32xf32>
    %412 = arith.divf %410, %411 : vector<4x32xf32>
    %413 = vector.extract_strided_slice %391 {offsets = [0, 64], sizes = [4, 32], strides = [1, 1]} : vector<4x96xf32> to vector<4x32xf32>
    %414 = vector.extract_strided_slice %396 {offsets = [0, 64], sizes = [4, 32], strides = [1, 1]} : vector<4x96xf32> to vector<4x32xf32>
    %415 = arith.mulf %404, %414 : vector<4x32xf32>
    %416 = arith.addf %413, %415 : vector<4x32xf32>
    %417 = math.tanh %416 : vector<4x32xf32>
    %418 = tpu.concatenate %372, %373 in 0 : vector<2x32xf32>, vector<2x32xf32> -> vector<4x32xf32>
    %cst_114 = arith.constant 1.000000e+00 : f32
    %419 = vector.broadcast %cst_114 : f32 to vector<4x32xf32>
    %420 = arith.subf %419, %412 : vector<4x32xf32>
    %421 = arith.mulf %420, %417 : vector<4x32xf32>
    %422 = arith.mulf %412, %418 : vector<4x32xf32>
    %423 = arith.addf %421, %422 : vector<4x32xf32>
    %424 = vector.extract_strided_slice %423 {offsets = [0, 0], sizes = [2, 32], strides = [1, 1]} : vector<4x32xf32> to vector<2x32xf32>
    %425 = vector.extract_strided_slice %423 {offsets = [2, 0], sizes = [2, 32], strides = [1, 1]} : vector<4x32xf32> to vector<2x32xf32>
    %426 = arith.index_cast %c7_i32_105 : i32 to index
    %c0_115 = arith.constant 0 : index
    %c0_116 = arith.constant 0 : index
    %427 = vector.load %arg8[%426, %c0_115, %c0_116] : memref<8x2x64xf32, #tpu.memory_space<vmem>>, vector<1x2x32xf32>
    %428 = vector.shape_cast %427 : vector<1x2x32xf32> to vector<2x32xf32>
    %429 = vector.shape_cast %424 : vector<2x32xf32> to vector<1x2x32xf32>
    tpu.vector_store %arg8[%426, %c0_115, %c0_116], %429 {strides = array<i32>} : memref<8x2x64xf32, #tpu.memory_space<vmem>>, vector<1x2x32xf32>,
    %430 = arith.index_cast %382 : i32 to index
    %c0_117 = arith.constant 0 : index
    %c32_118 = arith.constant 32 : index
    %431 = vector.load %arg8[%430, %c0_117, %c32_118] : memref<8x2x64xf32, #tpu.memory_space<vmem>>, vector<1x2x32xf32>
    %432 = vector.shape_cast %431 : vector<1x2x32xf32> to vector<2x32xf32>
    %433 = vector.shape_cast %425 : vector<2x32xf32> to vector<1x2x32xf32>
    tpu.vector_store %arg8[%430, %c0_117, %c32_118], %433 {strides = array<i32>} : memref<8x2x64xf32, #tpu.memory_space<vmem>>, vector<1x2x32xf32>,
    %c8_i32 = arith.constant 8 : i32
    %434 = tpu.concatenate %424, %425 in 1 : vector<2x32xf32>, vector<2x32xf32> -> vector<2x64xf32>
    %c0_119 = arith.constant 0 : index
    %c0_120 = arith.constant 0 : index
    %435 = vector.load %arg6[%c0_119, %c0_120] : memref<64x32xf32, #tpu.memory_space<vmem>>, vector<64x32xf32>
    %cst_121 = arith.constant dense<0.000000e+00> : vector<2x32xf32>
    %436 = tpu.matmul %434, %435, %cst_121 {dimension_numbers = #tpu.dot_dimension_numbers<[1], [0], [0], [1], [0, 0, 1, 1], [], []>} : vector<2x64xf32>, vector<64x32xf32>, vector<2x32xf32> -> vector<2x32xf32>
    %c0_122 = arith.constant 0 : index
    %c0_123 = arith.constant 0 : index
    %437 = vector.load %arg7[%c0_122, %c0_123] : memref<1x32xf32, #tpu.memory_space<vmem>>, vector<1x32xf32>
    %438 = vector.broadcast %437 : vector<1x32xf32> to vector<2x32xf32>
    %439 = arith.addf %436, %438 : vector<2x32xf32>
    %440 = math.tanh %439 : vector<2x32xf32>
    %c0_124 = arith.constant 0 : index
    %c0_125 = arith.constant 0 : index
    %441 = vector.load %arg9[%c0_124, %c0_125] : memref<2x32xf32, #tpu.memory_space<vmem>>, vector<2x32xf32>
    tpu.vector_store %arg9[%c0_124, %c0_125], %440 {strides = array<i32>} : memref<2x32xf32, #tpu.memory_space<vmem>>, vector<2x32xf32>,
    return
  }
}

</mosaic_0001>

<llo_original>
// kernel: tpu_custom_call.1
$region0: #{tpu_custom_call.1}
  #allocation0 [shape = 'u32[]', space=smem, size = 0x4, offset = 0x4, fixed_abs, tag = 'smem constant byte address 0x4 - core index']
  #allocation1 [shape = 'u32[144,128]{1,0:T(1,128)}', space=vmem, size = 0x12000, scoped, tag = 'internal scratch']
  #allocation2 [shape = 'f32[8,2,192]{2,1,0:T(2,128)}', space=vmem, size = 0x4000, scoped, tag = 'scratch operand']
  %s0 = inlined_call_operand.vmem [shape: f32[16,32], index: 0, kind: input, shape index: {}]
  %s1 = inlined_call_operand.vmem [shape: f32[32,192], index: 1, kind: input, shape index: {}]
  %s2 = inlined_call_operand.hbm [shape: f32[64,96], index: 2, kind: input, shape index: {}]
  %s3 = inlined_call_operand.vmem [shape: f32[1,192], index: 3, kind: input, shape index: {}]
  %s4 = inlined_call_operand.vmem [shape: f32[1,96], index: 4, kind: input, shape index: {}]
  %s5 = inlined_call_operand.vmem [shape: f32[1,96], index: 5, kind: input, shape index: {}]
  %s6 = inlined_call_operand.vmem [shape: f32[64,32], index: 6, kind: input, shape index: {}]
  %s7 = inlined_call_operand.vmem [shape: f32[1,32], index: 7, kind: input, shape index: {}]
  %s8 = inlined_call_operand.hbm [shape: f32[8,2,64], index: 8, kind: output, shape index: {0}]
  %s9 = inlined_call_operand.hbm [shape: f32[2,32], index: 9, kind: output, shape index: {1}]
  %10 = xla_tuple %s8, %s9
  %s11 = sld [smem:[#allocation0]]
  $region54: #{tpu_custom_call.1} parent=0
    _
  %s13 = ssub.s32 1, %s11
  %s14 = scalar_select 0, %s13, %s11
  $region1: #{tpu_custom_call.1} parent=0
    #allocation3 [shape = 'u8[32768]{0}', space=vmem, size = 0x8000, scoped, tag = 'input window, operand 2, single buffered']
    #allocation4 [shape = 's32[1]{0}', space=sflag, size = 0x4, scoped, tag = 'scoped memory for tpu_custom_call.1']
    #allocation5 [shape = 's32[1]{0}', space=sflag, size = 0x4, scoped, tag = 'scoped memory for tpu_custom_call.1']
    #allocation6 [shape = 'u8[8192]{0}', space=vmem, size = 0x2000, scoped, tag = 'output window, operand 0, single buffered']
    #allocation7 [shape = 'u8[1024]{0}', space=vmem, size = 0x400, scoped, tag = 'output window, operand 1, single buffered']
    #allocation8 [shape = 's32[1]{0}', space=sflag, size = 0x4, scoped, tag = 'scoped memory for tpu_custom_call.1']
    %15 = vsyncpa [#allocation4], 0
    %16 = vsyncpa [#allocation5], 0
    %17 = vsyncpa [#allocation8], 0
    // Predicated region
    $region2: #{tpu_custom_call.1} parent=1 // pred_check
      _
    $region3: #{tpu_custom_call.1} parent=1 // pred_check_branch
      %19 = sbr.rel (0) target = $region5
    $region4: #{tpu_custom_call.1} parent=1 // pred_region
      _
    $region5: #{tpu_custom_call.1} parent=1 // pred_fallthru
      _
    // Predicated region
    $region6: #{tpu_custom_call.1} parent=1 // pred_check
      _
    $region7: #{tpu_custom_call.1} parent=1 // pred_check_branch
      %21 = sbr.rel (0) target = $region9
    $region8: #{tpu_custom_call.1} parent=1 // pred_region
      _
    $region9: #{tpu_custom_call.1} parent=1 // pred_fallthru
      _
    // Predicated region
    $region10: #{tpu_custom_call.1} parent=1 // pred_check
      _
    $region11: #{tpu_custom_call.1} parent=1 // pred_check_branch
      %23 = sbr.rel (0) target = $region13
    $region12: #{tpu_custom_call.1} parent=1 // pred_region
      %s25 = ssub.s32 1024, 1024
      %26 = vsyncadd [#allocation4], %s25
      %s27 = sshll.u32 [#allocation3], 4
      %s28 = int_to_ptr.vmem [resolvable:$true] %s27
      %33 = dma.hbm_to_vmem [thread:$0]  %s2, 1024, %s28, [#allocation4], 128, 128, 8
    $region13: #{tpu_custom_call.1} parent=1 // pred_fallthru
      _
    // Predicated region
    $region14: #{tpu_custom_call.1} parent=1 // pred_check
      _
    $region15: #{tpu_custom_call.1} parent=1 // pred_check_branch
      %35 = sbr.rel (0) target = $region17
    $region16: #{tpu_custom_call.1} parent=1 // pred_region
      _
    $region17: #{tpu_custom_call.1} parent=1 // pred_fallthru
      _
    // Predicated region
    $region18: #{tpu_custom_call.1} parent=1 // pred_check
      _
    $region19: #{tpu_custom_call.1} parent=1 // pred_check_branch
      %37 = sbr.rel (0) target = $region21
    $region20: #{tpu_custom_call.1} parent=1 // pred_region
      _
    $region21: #{tpu_custom_call.1} parent=1 // pred_fallthru
      _
    // Predicated region
    $region22: #{tpu_custom_call.1} parent=1 // pred_check
      _
    $region23: #{tpu_custom_call.1} parent=1 // pred_check_branch
      %39 = sbr.rel (0) target = $region25
    $region24: #{tpu_custom_call.1} parent=1 // pred_region
      _
    $region25: #{tpu_custom_call.1} parent=1 // pred_fallthru
      _
    // Predicated region
    $region26: #{tpu_custom_call.1} parent=1 // pred_check
      _
    $region27: #{tpu_custom_call.1} parent=1 // pred_check_branch
      %41 = sbr.rel (0) target = $region29
    $region28: #{tpu_custom_call.1} parent=1 // pred_region
      _
    $region29: #{tpu_custom_call.1} parent=1 // pred_fallthru
      _
    // Predicated region
    $region30: #{tpu_custom_call.1} parent=1 // pred_check
      _
    $region31: #{tpu_custom_call.1} parent=1 // pred_check_branch
      %43 = sbr.rel (0) target = $region33
    $region32: #{tpu_custom_call.1} parent=1 // pred_region
      _
    $region33: #{tpu_custom_call.1} parent=1 // pred_fallthru
      _
    // Predicated region
    $region34: #{tpu_custom_call.1} parent=1 // pred_check
      _
    $region35: #{tpu_custom_call.1} parent=1 // pred_check_branch
      %45 = sbr.rel (0) target = $region37
    $region36: #{tpu_custom_call.1} parent=1 // pred_region
      %46 = dma.done [#allocation4], 1024
    $region37: #{tpu_custom_call.1} parent=1 // pred_fallthru
      _
    %v47 = vld [vmem:[%s0] sm:$0xff]
    %v48 = vld [vmem:[%s0 + $0x8] sm:$0xff]
    %v49 = vld [vmem:[%s1] sm:$0xff]
    %v50 = vld [vmem:[%s1 + $0x8] sm:$0xff]
    %v51 = vld [vmem:[%s1 + $0x10] sm:$0xff]
    %v52 = vld [vmem:[%s1 + $0x18] sm:$0xff]
    %v53 = vld [vmem:[%s1 + $0x20] sm:$0xff]
    %v54 = vld [vmem:[%s1 + $0x28] sm:$0xff]
    %v55 = vld [vmem:[%s1 + $0x30] sm:$0xff]
    %v56 = vld [vmem:[%s1 + $0x38] sm:$0xff]
    %v57 = vld [vmem:[%s3] sm:$0x3]
    %v59 = vlaneseq
    %v60 = vshrl.u32 %v59, 7
    %v61 = vsub.s32 0, %v60
    %v62 = vrot.slane %v57, %v61
    %v63 = vlaneseq
    %v64 = vshrl.u32 %v63, 7
    %v65 = vsub.s32 1, %v64
    %v66 = vrot.slane %v57, %v65
    %vm69 = vcmask 261120
    %v71 = vsel %vm69, %v47, 0
    %v74 = vsel %vm69, %v48, 0
    %76 = vmatprep.subr.mxu0 0.0
    %77 = vmatpush1.msra.mxu0 0.0
    %78 = vmatprep.subr.mxu0 0.0
    %79 = vmatpush1.msra.mxu0 0.0
    %80 = vmatprep.subr.mxu0 0.0
    %81 = vmatpush1.msra.mxu0 0.0
    %82 = vmatprep.subr.mxu0 0.0
    %83 = vmatpush1.msra.mxu0 0.0
    %84 = vmatprep.subr.mxu0 0.0
    %85 = vmatpush1.msra.mxu0 0.0
    %86 = vmatprep.subr.mxu0 0.0
    %87 = vmatpush1.msra.mxu0 0.0
    %88 = vmatprep.subr.mxu0 0.0
    %89 = vmatpush1.msra.mxu0 0.0
    %90 = vmatprep.subr.mxu0 0.0
    %91 = vmatpush1.msra.mxu0 0.0
    %92 = vmatprep.subr.mxu0 0.0
    %93 = vmatpush1.msra.mxu0 0.0
    %94 = vmatprep.subr.mxu0 0.0
    %95 = vmatpush1.msra.mxu0 0.0
    %96 = vmatprep.subr.mxu0 0.0
    %97 = vmatpush1.msra.mxu0 0.0
    %98 = vmatprep.subr.mxu0 0.0
    %99 = vmatpush1.msra.mxu0 0.0
    %100 = vmatprep.subr.mxu0 %v56
    %101 = vmatpush1.msra.mxu0 %v55
    %102 = vmatprep.subr.mxu0 %v54
    %103 = vmatpush1.msra.mxu0 %v53
    %104 = vmatprep.subr.mxu0 %v52
    %105 = vmatpush1.msra.mxu0 %v51
    %106 = vmatprep.subr.mxu0 %v50
    %107 = vmatpush1.msra.mxu0 %v49
    %108 = vmatprep.subr.mxu0 0.0
    %109 = vmatpush2.msra.mxu0 0.0
    %110 = vmatprep.subr.mxu0 0.0
    %111 = vmatpush2.msra.mxu0 0.0
    %112 = vmatprep.subr.mxu0 0.0
    %113 = vmatpush2.msra.mxu0 0.0
    %114 = vmatprep.subr.mxu0 0.0
    %115 = vmatpush2.msra.mxu0 0.0
    %116 = vmatprep.subr.mxu0 0.0
    %117 = vmatpush2.msra.mxu0 0.0
    %118 = vmatprep.subr.mxu0 0.0
    %119 = vmatpush2.msra.mxu0 0.0
    %120 = vmatprep.subr.mxu0 0.0
    %121 = vmatpush2.msra.mxu0 0.0
    %122 = vmatprep.subr.mxu0 0.0
    %123 = vmatpush2.msra.mxu0 0.0
    %124 = vmatprep.subr.mxu0 0.0
    %125 = vmatpush2.msra.mxu0 0.0
    %126 = vmatprep.subr.mxu0 0.0
    %127 = vmatpush2.msra.mxu0 0.0
    %128 = vmatprep.subr.mxu0 0.0
    %129 = vmatpush2.msra.mxu0 0.0
    %130 = vmatprep.subr.mxu0 0.0
    %131 = vmatpush2.msra.mxu0 0.0
    %132 = vmatprep.subr.mxu0 0.0
    %133 = vmatpush2.msra.mxu0 0.0
    %134 = vmatprep.subr.mxu0 0.0
    %135 = vmatpush2.msra.mxu0 0.0
    %136 = vmatprep.subr.mxu0 0.0
    %137 = vmatpush2.msra.mxu0 0.0
    %138 = vmatprep.subr.mxu0 0.0
    %139 = vmatpush2.msra.mxu0 0.0
    %140 = vmatprep.mubr.f32.mxu0 0.0
    %141 = vmatmul.mubr.f32.gmra.mxu0 %v71
    %v142 = vpop.f32.mrf.mxu0
    %v143 = vadd.f32 %v62, %v142
    %v144 = vpop.f32.mrf.mxu0
    %v145 = vadd.f32 %v66, %v144
    %146 = vmatprep.mubr.f32.mxu0 0.0
    %147 = vmatmul.mubr.f32.gmra.mxu0 %v74
    %v148 = vpop.f32.mrf.mxu0
    %v149 = vadd.f32 %v62, %v148
    %v150 = vpop.f32.mrf.mxu0
    %v151 = vadd.f32 %v66, %v150
    %152 = vdwg.mxu0
    %v157 = vcombine.low %v143, %v145
    %v158 = vcombine.high %v143, %v145
    %v160 = vunpack.c.l.s4 1983009808
    %v161 = vunpack.c.0.s8 %v160
    %v162 = vlaneseq
    %v163 = vshrl.u32 %v162, 7
    %v164 = vsub.s32 %v161, %v163
    %v165 = vrot.slane %v157, %v164
    %v167 = vunpack.c.l.s4 1983009808
    %v168 = vunpack.c.0.s8 %v167
    %v169 = vlaneseq
    %v170 = vshrl.u32 %v169, 7
    %v171 = vsub.s32 %v168, %v170
    %v172 = vrot.slane %v158, %v171
    %v173 = vcombine.high %v165, %v165
    %v174 = vcombine.high %v172, %v172
    %v175 = vcombine.low %v149, %v151
    %v176 = vcombine.high %v149, %v151
    %v178 = vunpack.c.l.s4 1983009808
    %v179 = vunpack.c.0.s8 %v178
    %v180 = vlaneseq
    %v181 = vshrl.u32 %v180, 7
    %v182 = vsub.s32 %v179, %v181
    %v183 = vrot.slane %v175, %v182
    %v185 = vunpack.c.l.s4 1983009808
    %v186 = vunpack.c.0.s8 %v185
    %v187 = vlaneseq
    %v188 = vshrl.u32 %v187, 7
    %v189 = vsub.s32 %v186, %v188
    %v190 = vrot.slane %v176, %v189
    %v191 = vcombine.high %v183, %v183
    %v192 = vcombine.high %v190, %v190
    %vm201 = vcmask 1041408
    %vm202 = vcmask 519170
    %vm203 = vmor %vm202, %vm201
    %204 = vst.msk [vmem:[#allocation2] sm:$0xf] %vm203, %v165
    %205 = vst.msk [vmem:[#allocation2 + $0x4] sm:$0xf] %vm203, %v173
    %206 = vst.msk [vmem:[#allocation2 + $0x8] sm:$0xf] %vm203, %v172
    %207 = vst.msk [vmem:[#allocation2 + $0xc] sm:$0xf] %vm203, %v174
    %208 = vst.msk [vmem:[#allocation2 + $0x10] sm:$0xf] %vm203, %v183
    %209 = vst.msk [vmem:[#allocation2 + $0x14] sm:$0xf] %vm203, %v191
    %210 = vst.msk [vmem:[#allocation2 + $0x18] sm:$0xf] %vm203, %v190
    %211 = vst.msk [vmem:[#allocation2 + $0x1c] sm:$0xf] %vm203, %v192
    %v212 = vld [vmem:[#allocation3] sm:$0xff]
    %v213 = vld [vmem:[#allocation3 + $0x8] sm:$0xff]
    %v214 = vld [vmem:[#allocation3 + $0x10] sm:$0xff]
    %v215 = vld [vmem:[#allocation3 + $0x18] sm:$0xff]
    %v216 = vld [vmem:[#allocation3 + $0x20] sm:$0xff]
    %v217 = vld [vmem:[#allocation3 + $0x28] sm:$0xff]
    %v218 = vld [vmem:[#allocation3 + $0x30] sm:$0xff]
    %v219 = vld [vmem:[#allocation3 + $0x38] sm:$0xff]
    %v220 = vld [vmem:[%s4] sm:$0x1]
    %v222 = vlaneseq
    %v223 = vshrl.u32 %v222, 7
    %v224 = vsub.s32 0, %v223
    %v225 = vrot.slane %v220, %v224
    %v227 = vld [vmem:[%s5] sm:$0x1]
    %v229 = vlaneseq
    %v230 = vshrl.u32 %v229, 7
    %v231 = vsub.s32 0, %v230
    %v232 = vrot.slane %v227, %v231
    %v234 = vsel %vm201, %v225, %v232
    %v235 = vld [vmem:[#allocation2] sm:$0xf]
    %s236 = scalar_lea.vmem [#allocation2], 28
    %v237 = vld [vmem:[%s236] sm:$0xf]
    %v239 = vcombine.low %v237, %v237
    %v241 = vunpack.c.l.s4 1983009808
    %v242 = vunpack.c.0.s8 %v241
    %v243 = vlaneseq
    %v244 = vshrl.u32 %v243, 7
    %v245 = vsub.s32 %v242, %v244
    %v246 = vrot.slane %v239, %v245
    %v247 = vcombine.high %v246, %v246
    %248 = vrot.lane.b32.xlu0 %v246, 32
    %v249 = vpop.permute.xlu0 %248
    %250 = vrot.lane.b32.xlu0 %v247, 32
    %v251 = vpop.permute.xlu0 %250
    %v252 = vsel %vm69, %v249, %v251
    %v254 = vsel %vm201, %v235, %v252
    %v256 = vrot.slane 0.0, 6
    %v258 = vsel %vm201, 0.0, %v256
    %vm259 = vcmask 523264
    %v261 = vsel %vm259, %v258, 0
    %263 = vmatprep.subr.mxu0 0.0
    %264 = vmatpush1.msra.mxu0 0.0
    %265 = vmatprep.subr.mxu0 0.0
    %266 = vmatpush1.msra.mxu0 0.0
    %267 = vmatprep.subr.mxu0 0.0
    %268 = vmatpush1.msra.mxu0 0.0
    %269 = vmatprep.subr.mxu0 0.0
    %270 = vmatpush1.msra.mxu0 0.0
    %271 = vmatprep.subr.mxu0 0.0
    %272 = vmatpush1.msra.mxu0 0.0
    %273 = vmatprep.subr.mxu0 0.0
    %274 = vmatpush1.msra.mxu0 0.0
    %275 = vmatprep.subr.mxu0 0.0
    %276 = vmatpush1.msra.mxu0 0.0
    %277 = vmatprep.subr.mxu0 0.0
    %278 = vmatpush1.msra.mxu0 0.0
    %279 = vmatprep.subr.mxu0 0.0
    %280 = vmatpush1.msra.mxu0 %v219
    %281 = vmatprep.subr.mxu0 0.0
    %282 = vmatpush1.msra.mxu0 %v218
    %283 = vmatprep.subr.mxu0 0.0
    %284 = vmatpush1.msra.mxu0 %v217
    %285 = vmatprep.subr.mxu0 0.0
    %286 = vmatpush1.msra.mxu0 %v216
    %287 = vmatprep.subr.mxu0 0.0
    %288 = vmatpush1.msra.mxu0 %v215
    %289 = vmatprep.subr.mxu0 0.0
    %290 = vmatpush1.msra.mxu0 %v214
    %291 = vmatprep.subr.mxu0 0.0
    %292 = vmatpush1.msra.mxu0 %v213
    %293 = vmatprep.subr.mxu0 0.0
    %294 = vmatpush1.msra.mxu0 %v212
    %295 = vmatprep.subr.mxu0 0.0
    %296 = vmatpush2.msra.mxu0 0.0
    %297 = vmatprep.subr.mxu0 0.0
    %298 = vmatpush2.msra.mxu0 0.0
    %299 = vmatprep.subr.mxu0 0.0
    %300 = vmatpush2.msra.mxu0 0.0
    %301 = vmatprep.subr.mxu0 0.0
    %302 = vmatpush2.msra.mxu0 0.0
    %303 = vmatprep.subr.mxu0 0.0
    %304 = vmatpush2.msra.mxu0 0.0
    %305 = vmatprep.subr.mxu0 0.0
    %306 = vmatpush2.msra.mxu0 0.0
    %307 = vmatprep.subr.mxu0 0.0
    %308 = vmatpush2.msra.mxu0 0.0
    %309 = vmatprep.subr.mxu0 0.0
    %310 = vmatpush2.msra.mxu0 0.0
    %311 = vmatprep.subr.mxu0 0.0
    %312 = vmatpush2.msra.mxu0 0.0
    %313 = vmatprep.subr.mxu0 0.0
    %314 = vmatpush2.msra.mxu0 0.0
    %315 = vmatprep.subr.mxu0 0.0
    %316 = vmatpush2.msra.mxu0 0.0
    %317 = vmatprep.subr.mxu0 0.0
    %318 = vmatpush2.msra.mxu0 0.0
    %319 = vmatprep.subr.mxu0 0.0
    %320 = vmatpush2.msra.mxu0 0.0
    %321 = vmatprep.subr.mxu0 0.0
    %322 = vmatpush2.msra.mxu0 0.0
    %323 = vmatprep.subr.mxu0 0.0
    %324 = vmatpush2.msra.mxu0 0.0
    %325 = vmatprep.subr.mxu0 0.0
    %326 = vmatpush2.msra.mxu0 0.0
    %327 = vmatprep.mubr.f32.mxu0 0.0
    %328 = vmatmul.mubr.f32.gmra.mxu0 %v261
    %v329 = vpop.f32.mrf.mxu0
    %v330 = vadd.f32 %v234, %v329
    %v331 = vpop.f32.mrf.mxu0
    %332 = vdwg.mxu0
    %v333 = vadd.f32 %v254, %v330
    %v334 = vxor.u32 %v333, 2147483648
    %v335 = vmul.f32 %v334, 1.442695
    %v336 = vpow.pop %v335
    %v337 = vadd.f32 %v336, 1.0
    %v338 = vrcp.pop %v337
    %v339 = vmul.f32 1.0, %v338
    %341 = vrot.lane.b32.xlu0 %v330, 64
    %v342 = vpop.permute.xlu0 %341
    %v344 = vmul.f32 %v339, %v342
    %346 = vrot.lane.b32.xlu0 %v344, 64
    %v347 = vpop.permute.xlu0 %346
    %v349 = vadd.f32 %v254, %v347
    %v350 = vtanh.pop %v349
    %v351 = vsub.f32 1.0, %v339
    %353 = vrot.lane.b32.xlu0 %v350, 96
    %v354 = vpop.permute.xlu0 %353
    %v356 = vmul.f32 %v351, %v354
    %357 = vrot.lane.b32.xlu0 0.0, 32
    %v358 = vpop.permute.xlu0 %357
    %v360 = vmul.f32 %v339, %v358
    %v361 = vadd.f32 %v356, %v360
    %363 = vrot.lane.b32.xlu0 %v361, 96
    %v364 = vpop.permute.xlu0 %363
    %vm366 = vcmask 254976
    %367 = vst.msk [vmem:[#allocation6] sm:$0x3] %vm366, %v364
    %s368 = scalar_lea.vmem [#allocation6], 14
    %vm369 = vcmask 519426
    %370 = vst.msk [vmem:[%s368 - $0x2] sm:$0xc] %vm369, %v361
    %s371 = scalar_lea.vmem [#allocation2], 4
    %v372 = vld [vmem:[%s371] sm:$0xf]
    %s373 = scalar_lea.vmem [#allocation2], 24
    %v374 = vld [vmem:[%s373] sm:$0xf]
    %v376 = vcombine.low %v374, %v374
    %v378 = vunpack.c.l.s4 1983009808
    %v379 = vunpack.c.0.s8 %v378
    %v380 = vlaneseq
    %v381 = vshrl.u32 %v380, 7
    %v382 = vsub.s32 %v379, %v381
    %v383 = vrot.slane %v376, %v382
    %v384 = vcombine.high %v383, %v383
    %385 = vrot.lane.b32.xlu0 %v383, 32
    %v386 = vpop.permute.xlu0 %385
    %387 = vrot.lane.b32.xlu0 %v384, 32
    %v388 = vpop.permute.xlu0 %387
    %v389 = vsel %vm69, %v386, %v388
    %v391 = vsel %vm201, %v372, %v389
    %v392 = vsel %vm69, %v364, 0.0
    %v393 = vrot.slane %v361, 2
    %v395 = vsel %vm69, 0.0, %v393
    %v397 = vrot.slane %v395, 6
    %v399 = vsel %vm201, %v392, %v397
    %v401 = vsel %vm259, %v399, 0
    %403 = vmatprep.subr.mxu0 0.0
    %404 = vmatpush1.msra.mxu0 0.0
    %405 = vmatprep.subr.mxu0 0.0
    %406 = vmatpush1.msra.mxu0 0.0
    %407 = vmatprep.subr.mxu0 0.0
    %408 = vmatpush1.msra.mxu0 0.0
    %409 = vmatprep.subr.mxu0 0.0
    %410 = vmatpush1.msra.mxu0 0.0
    %411 = vmatprep.subr.mxu0 0.0
    %412 = vmatpush1.msra.mxu0 0.0
    %413 = vmatprep.subr.mxu0 0.0
    %414 = vmatpush1.msra.mxu0 0.0
    %415 = vmatprep.subr.mxu0 0.0
    %416 = vmatpush1.msra.mxu0 0.0
    %417 = vmatprep.subr.mxu0 0.0
    %418 = vmatpush1.msra.mxu0 0.0
    %419 = vmatprep.subr.mxu0 0.0
    %420 = vmatpush1.msra.mxu0 %v219
    %421 = vmatprep.subr.mxu0 0.0
    %422 = vmatpush1.msra.mxu0 %v218
    %423 = vmatprep.subr.mxu0 0.0
    %424 = vmatpush1.msra.mxu0 %v217
    %425 = vmatprep.subr.mxu0 0.0
    %426 = vmatpush1.msra.mxu0 %v216
    %427 = vmatprep.subr.mxu0 0.0
    %428 = vmatpush1.msra.mxu0 %v215
    %429 = vmatprep.subr.mxu0 0.0
    %430 = vmatpush1.msra.mxu0 %v214
    %431 = vmatprep.subr.mxu0 0.0
    %432 = vmatpush1.msra.mxu0 %v213
    %433 = vmatprep.subr.mxu0 0.0
    %434 = vmatpush1.msra.mxu0 %v212
    %435 = vmatprep.subr.mxu0 0.0
    %436 = vmatpush2.msra.mxu0 0.0
    %437 = vmatprep.subr.mxu0 0.0
    %438 = vmatpush2.msra.mxu0 0.0
    %439 = vmatprep.subr.mxu0 0.0
    %440 = vmatpush2.msra.mxu0 0.0
    %441 = vmatprep.subr.mxu0 0.0
    %442 = vmatpush2.msra.mxu0 0.0
    %443 = vmatprep.subr.mxu0 0.0
    %444 = vmatpush2.msra.mxu0 0.0
    %445 = vmatprep.subr.mxu0 0.0
    %446 = vmatpush2.msra.mxu0 0.0
    %447 = vmatprep.subr.mxu0 0.0
    %448 = vmatpush2.msra.mxu0 0.0
    %449 = vmatprep.subr.mxu0 0.0
    %450 = vmatpush2.msra.mxu0 0.0
    %451 = vmatprep.subr.mxu0 0.0
    %452 = vmatpush2.msra.mxu0 0.0
    %453 = vmatprep.subr.mxu0 0.0
    %454 = vmatpush2.msra.mxu0 0.0
    %455 = vmatprep.subr.mxu0 0.0
    %456 = vmatpush2.msra.mxu0 0.0
    %457 = vmatprep.subr.mxu0 0.0
    %458 = vmatpush2.msra.mxu0 0.0
    %459 = vmatprep.subr.mxu0 0.0
    %460 = vmatpush2.msra.mxu0 0.0
    %461 = vmatprep.subr.mxu0 0.0
    %462 = vmatpush2.msra.mxu0 0.0
    %463 = vmatprep.subr.mxu0 0.0
    %464 = vmatpush2.msra.mxu0 0.0
    %465 = vmatprep.subr.mxu0 0.0
    %466 = vmatpush2.msra.mxu0 0.0
    %467 = vmatprep.mubr.f32.mxu0 0.0
    %468 = vmatmul.mubr.f32.gmra.mxu0 %v401
    %v469 = vpop.f32.mrf.mxu0
    %v470 = vadd.f32 %v234, %v469
    %v471 = vpop.f32.mrf.mxu0
    %472 = vdwg.mxu0
    %v473 = vadd.f32 %v391, %v470
    %v474 = vxor.u32 %v473, 2147483648
    %v475 = vmul.f32 %v474, 1.442695
    %v476 = vpow.pop %v475
    %v477 = vadd.f32 %v476, 1.0
    %v478 = vrcp.pop %v477
    %v479 = vmul.f32 1.0, %v478
    %481 = vrot.lane.b32.xlu0 %v470, 64
    %v482 = vpop.permute.xlu0 %481
    %v484 = vmul.f32 %v479, %v482
    %486 = vrot.lane.b32.xlu0 %v484, 64
    %v487 = vpop.permute.xlu0 %486
    %v489 = vadd.f32 %v391, %v487
    %v490 = vtanh.pop %v489
    %v491 = vsub.f32 1.0, %v479
    %493 = vrot.lane.b32.xlu0 %v490, 96
    %v494 = vpop.permute.xlu0 %493
    %v496 = vmul.f32 %v491, %v494
    %v497 = vmul.f32 %v479, %v361
    %v498 = vadd.f32 %v496, %v497
    %500 = vrot.lane.b32.xlu0 %v498, 96
    %v501 = vpop.permute.xlu0 %500
    %s503 = scalar_lea.vmem [#allocation6], 2
    %504 = vst.msk [vmem:[%s503] sm:$0x3] %vm366, %v501
    %s505 = scalar_lea.vmem [#allocation6], 12
    %506 = vst.msk [vmem:[%s505 - $0x2] sm:$0xc] %vm369, %v498
    %s507 = scalar_lea.vmem [#allocation2], 8
    %v508 = vld [vmem:[%s507] sm:$0xf]
    %s509 = scalar_lea.vmem [#allocation2], 20
    %v510 = vld [vmem:[%s509] sm:$0xf]
    %v512 = vcombine.low %v510, %v510
    %v514 = vunpack.c.l.s4 1983009808
    %v515 = vunpack.c.0.s8 %v514
    %v516 = vlaneseq
    %v517 = vshrl.u32 %v516, 7
    %v518 = vsub.s32 %v515, %v517
    %v519 = vrot.slane %v512, %v518
    %v520 = vcombine.high %v519, %v519
    %521 = vrot.lane.b32.xlu0 %v519, 32
    %v522 = vpop.permute.xlu0 %521
    %523 = vrot.lane.b32.xlu0 %v520, 32
    %v524 = vpop.permute.xlu0 %523
    %v525 = vsel %vm69, %v522, %v524
    %v527 = vsel %vm201, %v508, %v525
    %v528 = vsel %vm69, %v501, 0.0
    %v529 = vrot.slane %v498, 2
    %v531 = vsel %vm69, 0.0, %v529
    %v533 = vrot.slane %v531, 6
    %v535 = vsel %vm201, %v528, %v533
    %v537 = vsel %vm259, %v535, 0
    %539 = vmatprep.subr.mxu0 0.0
    %540 = vmatpush1.msra.mxu0 0.0
    %541 = vmatprep.subr.mxu0 0.0
    %542 = vmatpush1.msra.mxu0 0.0
    %543 = vmatprep.subr.mxu0 0.0
    %544 = vmatpush1.msra.mxu0 0.0
    %545 = vmatprep.subr.mxu0 0.0
    %546 = vmatpush1.msra.mxu0 0.0
    %547 = vmatprep.subr.mxu0 0.0
    %548 = vmatpush1.msra.mxu0 0.0
    %549 = vmatprep.subr.mxu0 0.0
    %550 = vmatpush1.msra.mxu0 0.0
    %551 = vmatprep.subr.mxu0 0.0
    %552 = vmatpush1.msra.mxu0 0.0
    %553 = vmatprep.subr.mxu0 0.0
    %554 = vmatpush1.msra.mxu0 0.0
    %555 = vmatprep.subr.mxu0 0.0
    %556 = vmatpush1.msra.mxu0 %v219
    %557 = vmatprep.subr.mxu0 0.0
    %558 = vmatpush1.msra.mxu0 %v218
    %559 = vmatprep.subr.mxu0 0.0
    %560 = vmatpush1.msra.mxu0 %v217
    %561 = vmatprep.subr.mxu0 0.0
    %562 = vmatpush1.msra.mxu0 %v216
    %563 = vmatprep.subr.mxu0 0.0
    %564 = vmatpush1.msra.mxu0 %v215
    %565 = vmatprep.subr.mxu0 0.0
    %566 = vmatpush1.msra.mxu0 %v214
    %567 = vmatprep.subr.mxu0 0.0
    %568 = vmatpush1.msra.mxu0 %v213
    %569 = vmatprep.subr.mxu0 0.0
    %570 = vmatpush1.msra.mxu0 %v212
    %571 = vmatprep.subr.mxu0 0.0
    %572 = vmatpush2.msra.mxu0 0.0
    %573 = vmatprep.subr.mxu0 0.0
    %574 = vmatpush2.msra.mxu0 0.0
    %575 = vmatprep.subr.mxu0 0.0
    %576 = vmatpush2.msra.mxu0 0.0
    %577 = vmatprep.subr.mxu0 0.0
    %578 = vmatpush2.msra.mxu0 0.0
    %579 = vmatprep.subr.mxu0 0.0
    %580 = vmatpush2.msra.mxu0 0.0
    %581 = vmatprep.subr.mxu0 0.0
    %582 = vmatpush2.msra.mxu0 0.0
    %583 = vmatprep.subr.mxu0 0.0
    %584 = vmatpush2.msra.mxu0 0.0
    %585 = vmatprep.subr.mxu0 0.0
    %586 = vmatpush2.msra.mxu0 0.0
    %587 = vmatprep.subr.mxu0 0.0
    %588 = vmatpush2.msra.mxu0 0.0
    %589 = vmatprep.subr.mxu0 0.0
    %590 = vmatpush2.msra.mxu0 0.0
    %591 = vmatprep.subr.mxu0 0.0
    %592 = vmatpush2.msra.mxu0 0.0
    %593 = vmatprep.subr.mxu0 0.0
    %594 = vmatpush2.msra.mxu0 0.0
    %595 = vmatprep.subr.mxu0 0.0
    %596 = vmatpush2.msra.mxu0 0.0
    %597 = vmatprep.subr.mxu0 0.0
    %598 = vmatpush2.msra.mxu0 0.0
    %599 = vmatprep.subr.mxu0 0.0
    %600 = vmatpush2.msra.mxu0 0.0
    %601 = vmatprep.subr.mxu0 0.0
    %602 = vmatpush2.msra.mxu0 0.0
    %603 = vmatprep.mubr.f32.mxu0 0.0
    %604 = vmatmul.mubr.f32.gmra.mxu0 %v537
    %v605 = vpop.f32.mrf.mxu0
    %v606 = vadd.f32 %v234, %v605
    %v607 = vpop.f32.mrf.mxu0
    %608 = vdwg.mxu0
    %v609 = vadd.f32 %v527, %v606
    %v610 = vxor.u32 %v609, 2147483648
    %v611 = vmul.f32 %v610, 1.442695
    %v612 = vpow.pop %v611
    %v613 = vadd.f32 %v612, 1.0
    %v614 = vrcp.pop %v613
    %v615 = vmul.f32 1.0, %v614
    %617 = vrot.lane.b32.xlu0 %v606, 64
    %v618 = vpop.permute.xlu0 %617
    %v620 = vmul.f32 %v615, %v618
    %622 = vrot.lane.b32.xlu0 %v620, 64
    %v623 = vpop.permute.xlu0 %622
    %v625 = vadd.f32 %v527, %v623
    %v626 = vtanh.pop %v625
    %v627 = vsub.f32 1.0, %v615
    %629 = vrot.lane.b32.xlu0 %v626, 96
    %v630 = vpop.permute.xlu0 %629
    %v632 = vmul.f32 %v627, %v630
    %v633 = vmul.f32 %v615, %v498
    %v634 = vadd.f32 %v632, %v633
    %636 = vrot.lane.b32.xlu0 %v634, 96
    %v637 = vpop.permute.xlu0 %636
    %s639 = scalar_lea.vmem [#allocation6], 4
    %640 = vst.msk [vmem:[%s639] sm:$0x3] %vm366, %v637
    %s641 = scalar_lea.vmem [#allocation6], 10
    %642 = vst.msk [vmem:[%s641 - $0x2] sm:$0xc] %vm369, %v634
    %s643 = scalar_lea.vmem [#allocation2], 12
    %v644 = vld [vmem:[%s643] sm:$0xf]
    %s645 = scalar_lea.vmem [#allocation2], 16
    %v646 = vld [vmem:[%s645] sm:$0xf]
    %v648 = vcombine.low %v646, %v646
    %v650 = vunpack.c.l.s4 1983009808
    %v651 = vunpack.c.0.s8 %v650
    %v652 = vlaneseq
    %v653 = vshrl.u32 %v652, 7
    %v654 = vsub.s32 %v651, %v653
    %v655 = vrot.slane %v648, %v654
    %v656 = vcombine.high %v655, %v655
    %657 = vrot.lane.b32.xlu0 %v655, 32
    %v658 = vpop.permute.xlu0 %657
    %659 = vrot.lane.b32.xlu0 %v656, 32
    %v660 = vpop.permute.xlu0 %659
    %v661 = vsel %vm69, %v658, %v660
    %v663 = vsel %vm201, %v644, %v661
    %v664 = vsel %vm69, %v637, 0.0
    %v665 = vrot.slane %v634, 2
    %v667 = vsel %vm69, 0.0, %v665
    %v669 = vrot.slane %v667, 6
    %v671 = vsel %vm201, %v664, %v669
    %v673 = vsel %vm259, %v671, 0
    %675 = vmatprep.subr.mxu0 0.0
    %676 = vmatpush1.msra.mxu0 0.0
    %677 = vmatprep.subr.mxu0 0.0
    %678 = vmatpush1.msra.mxu0 0.0
    %679 = vmatprep.subr.mxu0 0.0
    %680 = vmatpush1.msra.mxu0 0.0
    %681 = vmatprep.subr.mxu0 0.0
    %682 = vmatpush1.msra.mxu0 0.0
    %683 = vmatprep.subr.mxu0 0.0
    %684 = vmatpush1.msra.mxu0 0.0
    %685 = vmatprep.subr.mxu0 0.0
    %686 = vmatpush1.msra.mxu0 0.0
    %687 = vmatprep.subr.mxu0 0.0
    %688 = vmatpush1.msra.mxu0 0.0
    %689 = vmatprep.subr.mxu0 0.0
    %690 = vmatpush1.msra.mxu0 0.0
    %691 = vmatprep.subr.mxu0 0.0
    %692 = vmatpush1.msra.mxu0 %v219
    %693 = vmatprep.subr.mxu0 0.0
    %694 = vmatpush1.msra.mxu0 %v218
    %695 = vmatprep.subr.mxu0 0.0
    %696 = vmatpush1.msra.mxu0 %v217
    %697 = vmatprep.subr.mxu0 0.0
    %698 = vmatpush1.msra.mxu0 %v216
    %699 = vmatprep.subr.mxu0 0.0
    %700 = vmatpush1.msra.mxu0 %v215
    %701 = vmatprep.subr.mxu0 0.0
    %702 = vmatpush1.msra.mxu0 %v214
    %703 = vmatprep.subr.mxu0 0.0
    %704 = vmatpush1.msra.mxu0 %v213
    %705 = vmatprep.subr.mxu0 0.0
    %706 = vmatpush1.msra.mxu0 %v212
    %707 = vmatprep.subr.mxu0 0.0
    %708 = vmatpush2.msra.mxu0 0.0
    %709 = vmatprep.subr.mxu0 0.0
    %710 = vmatpush2.msra.mxu0 0.0
    %711 = vmatprep.subr.mxu0 0.0
    %712 = vmatpush2.msra.mxu0 0.0
    %713 = vmatprep.subr.mxu0 0.0
    %714 = vmatpush2.msra.mxu0 0.0
    %715 = vmatprep.subr.mxu0 0.0
    %716 = vmatpush2.msra.mxu0 0.0
    %717 = vmatprep.subr.mxu0 0.0
    %718 = vmatpush2.msra.mxu0 0.0
    %719 = vmatprep.subr.mxu0 0.0
    %720 = vmatpush2.msra.mxu0 0.0
    %721 = vmatprep.subr.mxu0 0.0
    %722 = vmatpush2.msra.mxu0 0.0
    %723 = vmatprep.subr.mxu0 0.0
    %724 = vmatpush2.msra.mxu0 0.0
    %725 = vmatprep.subr.mxu0 0.0
    %726 = vmatpush2.msra.mxu0 0.0
    %727 = vmatprep.subr.mxu0 0.0
    %728 = vmatpush2.msra.mxu0 0.0
    %729 = vmatprep.subr.mxu0 0.0
    %730 = vmatpush2.msra.mxu0 0.0
    %731 = vmatprep.subr.mxu0 0.0
    %732 = vmatpush2.msra.mxu0 0.0
    %733 = vmatprep.subr.mxu0 0.0
    %734 = vmatpush2.msra.mxu0 0.0
    %735 = vmatprep.subr.mxu0 0.0
    %736 = vmatpush2.msra.mxu0 0.0
    %737 = vmatprep.subr.mxu0 0.0
    %738 = vmatpush2.msra.mxu0 0.0
    %739 = vmatprep.mubr.f32.mxu0 0.0
    %740 = vmatmul.mubr.f32.gmra.mxu0 %v673
    %v741 = vpop.f32.mrf.mxu0
    %v742 = vadd.f32 %v234, %v741
    %v743 = vpop.f32.mrf.mxu0
    %744 = vdwg.mxu0
    %v745 = vadd.f32 %v663, %v742
    %v746 = vxor.u32 %v745, 2147483648
    %v747 = vmul.f32 %v746, 1.442695
    %v748 = vpow.pop %v747
    %v749 = vadd.f32 %v748, 1.0
    %v750 = vrcp.pop %v749
    %v751 = vmul.f32 1.0, %v750
    %753 = vrot.lane.b32.xlu0 %v742, 64
    %v754 = vpop.permute.xlu0 %753
    %v756 = vmul.f32 %v751, %v754
    %758 = vrot.lane.b32.xlu0 %v756, 64
    %v759 = vpop.permute.xlu0 %758
    %v761 = vadd.f32 %v663, %v759
    %v762 = vtanh.pop %v761
    %v763 = vsub.f32 1.0, %v751
    %765 = vrot.lane.b32.xlu0 %v762, 96
    %v766 = vpop.permute.xlu0 %765
    %v768 = vmul.f32 %v763, %v766
    %v769 = vmul.f32 %v751, %v634
    %v770 = vadd.f32 %v768, %v769
    %772 = vrot.lane.b32.xlu0 %v770, 96
    %v773 = vpop.permute.xlu0 %772
    %s775 = scalar_lea.vmem [#allocation6], 6
    %776 = vst.msk [vmem:[%s775] sm:$0x3] %vm366, %v773
    %s777 = scalar_lea.vmem [#allocation6], 8
    %778 = vst.msk [vmem:[%s777 - $0x2] sm:$0xc] %vm369, %v770
    %v779 = vld [vmem:[%s645] sm:$0xf]
    %v780 = vld [vmem:[%s643] sm:$0xf]
    %v782 = vcombine.low %v780, %v780
    %v784 = vunpack.c.l.s4 1983009808
    %v785 = vunpack.c.0.s8 %v784
    %v786 = vlaneseq
    %v787 = vshrl.u32 %v786, 7
    %v788 = vsub.s32 %v785, %v787
    %v789 = vrot.slane %v782, %v788
    %v790 = vcombine.high %v789, %v789
    %791 = vrot.lane.b32.xlu0 %v789, 32
    %v792 = vpop.permute.xlu0 %791
    %793 = vrot.lane.b32.xlu0 %v790, 32
    %v794 = vpop.permute.xlu0 %793
    %v795 = vsel %vm69, %v792, %v794
    %v797 = vsel %vm201, %v779, %v795
    %v798 = vsel %vm69, %v773, 0.0
    %v799 = vrot.slane %v770, 2
    %v801 = vsel %vm69, 0.0, %v799
    %v803 = vrot.slane %v801, 6
    %v805 = vsel %vm201, %v798, %v803
    %v807 = vsel %vm259, %v805, 0
    %809 = vmatprep.subr.mxu0 0.0
    %810 = vmatpush1.msra.mxu0 0.0
    %811 = vmatprep.subr.mxu0 0.0
    %812 = vmatpush1.msra.mxu0 0.0
    %813 = vmatprep.subr.mxu0 0.0
    %814 = vmatpush1.msra.mxu0 0.0
    %815 = vmatprep.subr.mxu0 0.0
    %816 = vmatpush1.msra.mxu0 0.0
    %817 = vmatprep.subr.mxu0 0.0
    %818 = vmatpush1.msra.mxu0 0.0
    %819 = vmatprep.subr.mxu0 0.0
    %820 = vmatpush1.msra.mxu0 0.0
    %821 = vmatprep.subr.mxu0 0.0
    %822 = vmatpush1.msra.mxu0 0.0
    %823 = vmatprep.subr.mxu0 0.0
    %824 = vmatpush1.msra.mxu0 0.0
    %825 = vmatprep.subr.mxu0 0.0
    %826 = vmatpush1.msra.mxu0 %v219
    %827 = vmatprep.subr.mxu0 0.0
    %828 = vmatpush1.msra.mxu0 %v218
    %829 = vmatprep.subr.mxu0 0.0
    %830 = vmatpush1.msra.mxu0 %v217
    %831 = vmatprep.subr.mxu0 0.0
    %832 = vmatpush1.msra.mxu0 %v216
    %833 = vmatprep.subr.mxu0 0.0
    %834 = vmatpush1.msra.mxu0 %v215
    %835 = vmatprep.subr.mxu0 0.0
    %836 = vmatpush1.msra.mxu0 %v214
    %837 = vmatprep.subr.mxu0 0.0
    %838 = vmatpush1.msra.mxu0 %v213
    %839 = vmatprep.subr.mxu0 0.0
    %840 = vmatpush1.msra.mxu0 %v212
    %841 = vmatprep.subr.mxu0 0.0
    %842 = vmatpush2.msra.mxu0 0.0
    %843 = vmatprep.subr.mxu0 0.0
    %844 = vmatpush2.msra.mxu0 0.0
    %845 = vmatprep.subr.mxu0 0.0
    %846 = vmatpush2.msra.mxu0 0.0
    %847 = vmatprep.subr.mxu0 0.0
    %848 = vmatpush2.msra.mxu0 0.0
    %849 = vmatprep.subr.mxu0 0.0
    %850 = vmatpush2.msra.mxu0 0.0
    %851 = vmatprep.subr.mxu0 0.0
    %852 = vmatpush2.msra.mxu0 0.0
    %853 = vmatprep.subr.mxu0 0.0
    %854 = vmatpush2.msra.mxu0 0.0
    %855 = vmatprep.subr.mxu0 0.0
    %856 = vmatpush2.msra.mxu0 0.0
    %857 = vmatprep.subr.mxu0 0.0
    %858 = vmatpush2.msra.mxu0 0.0
    %859 = vmatprep.subr.mxu0 0.0
    %860 = vmatpush2.msra.mxu0 0.0
    %861 = vmatprep.subr.mxu0 0.0
    %862 = vmatpush2.msra.mxu0 0.0
    %863 = vmatprep.subr.mxu0 0.0
    %864 = vmatpush2.msra.mxu0 0.0
    %865 = vmatprep.subr.mxu0 0.0
    %866 = vmatpush2.msra.mxu0 0.0
    %867 = vmatprep.subr.mxu0 0.0
    %868 = vmatpush2.msra.mxu0 0.0
    %869 = vmatprep.subr.mxu0 0.0
    %870 = vmatpush2.msra.mxu0 0.0
    %871 = vmatprep.subr.mxu0 0.0
    %872 = vmatpush2.msra.mxu0 0.0
    %873 = vmatprep.mubr.f32.mxu0 0.0
    %874 = vmatmul.mubr.f32.gmra.mxu0 %v807
    %v875 = vpop.f32.mrf.mxu0
    %v876 = vadd.f32 %v234, %v875
    %v877 = vpop.f32.mrf.mxu0
    %878 = vdwg.mxu0
    %v879 = vadd.f32 %v797, %v876
    %v880 = vxor.u32 %v879, 2147483648
    %v881 = vmul.f32 %v880, 1.442695
    %v882 = vpow.pop %v881
    %v883 = vadd.f32 %v882, 1.0
    %v884 = vrcp.pop %v883
    %v885 = vmul.f32 1.0, %v884
    %887 = vrot.lane.b32.xlu0 %v876, 64
    %v888 = vpop.permute.xlu0 %887
    %v890 = vmul.f32 %v885, %v888
    %892 = vrot.lane.b32.xlu0 %v890, 64
    %v893 = vpop.permute.xlu0 %892
    %v895 = vadd.f32 %v797, %v893
    %v896 = vtanh.pop %v895
    %v897 = vsub.f32 1.0, %v885
    %899 = vrot.lane.b32.xlu0 %v896, 96
    %v900 = vpop.permute.xlu0 %899
    %v902 = vmul.f32 %v897, %v900
    %v903 = vmul.f32 %v885, %v770
    %v904 = vadd.f32 %v902, %v903
    %906 = vrot.lane.b32.xlu0 %v904, 96
    %v907 = vpop.permute.xlu0 %906
    %909 = vst.msk [vmem:[%s777] sm:$0x3] %vm366, %v907
    %910 = vst.msk [vmem:[%s775 - $0x2] sm:$0xc] %vm369, %v904
    %v911 = vld [vmem:[%s509] sm:$0xf]
    %v912 = vld [vmem:[%s507] sm:$0xf]
    %v914 = vcombine.low %v912, %v912
    %v916 = vunpack.c.l.s4 1983009808
    %v917 = vunpack.c.0.s8 %v916
    %v918 = vlaneseq
    %v919 = vshrl.u32 %v918, 7
    %v920 = vsub.s32 %v917, %v919
    %v921 = vrot.slane %v914, %v920
    %v922 = vcombine.high %v921, %v921
    %923 = vrot.lane.b32.xlu0 %v921, 32
    %v924 = vpop.permute.xlu0 %923
    %925 = vrot.lane.b32.xlu0 %v922, 32
    %v926 = vpop.permute.xlu0 %925
    %v927 = vsel %vm69, %v924, %v926
    %v929 = vsel %vm201, %v911, %v927
    %v930 = vsel %vm69, %v907, 0.0
    %v931 = vrot.slane %v904, 2
    %v933 = vsel %vm69, 0.0, %v931
    %v935 = vrot.slane %v933, 6
    %v937 = vsel %vm201, %v930, %v935
    %v939 = vsel %vm259, %v937, 0
    %941 = vmatprep.subr.mxu0 0.0
    %942 = vmatpush1.msra.mxu0 0.0
    %943 = vmatprep.subr.mxu0 0.0
    %944 = vmatpush1.msra.mxu0 0.0
    %945 = vmatprep.subr.mxu0 0.0
    %946 = vmatpush1.msra.mxu0 0.0
    %947 = vmatprep.subr.mxu0 0.0
    %948 = vmatpush1.msra.mxu0 0.0
    %949 = vmatprep.subr.mxu0 0.0
    %950 = vmatpush1.msra.mxu0 0.0
    %951 = vmatprep.subr.mxu0 0.0
    %952 = vmatpush1.msra.mxu0 0.0
    %953 = vmatprep.subr.mxu0 0.0
    %954 = vmatpush1.msra.mxu0 0.0
    %955 = vmatprep.subr.mxu0 0.0
    %956 = vmatpush1.msra.mxu0 0.0
    %957 = vmatprep.subr.mxu0 0.0
    %958 = vmatpush1.msra.mxu0 %v219
    %959 = vmatprep.subr.mxu0 0.0
    %960 = vmatpush1.msra.mxu0 %v218
    %961 = vmatprep.subr.mxu0 0.0
    %962 = vmatpush1.msra.mxu0 %v217
    %963 = vmatprep.subr.mxu0 0.0
    %964 = vmatpush1.msra.mxu0 %v216
    %965 = vmatprep.subr.mxu0 0.0
    %966 = vmatpush1.msra.mxu0 %v215
    %967 = vmatprep.subr.mxu0 0.0
    %968 = vmatpush1.msra.mxu0 %v214
    %969 = vmatprep.subr.mxu0 0.0
    %970 = vmatpush1.msra.mxu0 %v213
    %971 = vmatprep.subr.mxu0 0.0
    %972 = vmatpush1.msra.mxu0 %v212
    %973 = vmatprep.subr.mxu0 0.0
    %974 = vmatpush2.msra.mxu0 0.0
    %975 = vmatprep.subr.mxu0 0.0
    %976 = vmatpush2.msra.mxu0 0.0
    %977 = vmatprep.subr.mxu0 0.0
    %978 = vmatpush2.msra.mxu0 0.0
    %979 = vmatprep.subr.mxu0 0.0
    %980 = vmatpush2.msra.mxu0 0.0
    %981 = vmatprep.subr.mxu0 0.0
    %982 = vmatpush2.msra.mxu0 0.0
    %983 = vmatprep.subr.mxu0 0.0
    %984 = vmatpush2.msra.mxu0 0.0
    %985 = vmatprep.subr.mxu0 0.0
    %986 = vmatpush2.msra.mxu0 0.0
    %987 = vmatprep.subr.mxu0 0.0
    %988 = vmatpush2.msra.mxu0 0.0
    %989 = vmatprep.subr.mxu0 0.0
    %990 = vmatpush2.msra.mxu0 0.0
    %991 = vmatprep.subr.mxu0 0.0
    %992 = vmatpush2.msra.mxu0 0.0
    %993 = vmatprep.subr.mxu0 0.0
    %994 = vmatpush2.msra.mxu0 0.0
    %995 = vmatprep.subr.mxu0 0.0
    %996 = vmatpush2.msra.mxu0 0.0
    %997 = vmatprep.subr.mxu0 0.0
    %998 = vmatpush2.msra.mxu0 0.0
    %999 = vmatprep.subr.mxu0 0.0
    %1000 = vmatpush2.msra.mxu0 0.0
    %1001 = vmatprep.subr.mxu0 0.0
    %1002 = vmatpush2.msra.mxu0 0.0
    %1003 = vmatprep.subr.mxu0 0.0
    %1004 = vmatpush2.msra.mxu0 0.0
    %1005 = vmatprep.mubr.f32.mxu0 0.0
    %1006 = vmatmul.mubr.f32.gmra.mxu0 %v939
    %v1007 = vpop.f32.mrf.mxu0
    %v1008 = vadd.f32 %v234, %v1007
    %v1009 = vpop.f32.mrf.mxu0
    %1010 = vdwg.mxu0
    %v1011 = vadd.f32 %v929, %v1008
    %v1012 = vxor.u32 %v1011, 2147483648
    %v1013 = vmul.f32 %v1012, 1.442695
    %v1014 = vpow.pop %v1013
    %v1015 = vadd.f32 %v1014, 1.0
    %v1016 = vrcp.pop %v1015
    %v1017 = vmul.f32 1.0, %v1016
    %1019 = vrot.lane.b32.xlu0 %v1008, 64
    %v1020 = vpop.permute.xlu0 %1019
    %v1022 = vmul.f32 %v1017, %v1020
    %1024 = vrot.lane.b32.xlu0 %v1022, 64
    %v1025 = vpop.permute.xlu0 %1024
    %v1027 = vadd.f32 %v929, %v1025
    %v1028 = vtanh.pop %v1027
    %v1029 = vsub.f32 1.0, %v1017
    %1031 = vrot.lane.b32.xlu0 %v1028, 96
    %v1032 = vpop.permute.xlu0 %1031
    %v1034 = vmul.f32 %v1029, %v1032
    %v1035 = vmul.f32 %v1017, %v904
    %v1036 = vadd.f32 %v1034, %v1035
    %1038 = vrot.lane.b32.xlu0 %v1036, 96
    %v1039 = vpop.permute.xlu0 %1038
    %1041 = vst.msk [vmem:[%s641] sm:$0x3] %vm366, %v1039
    %1042 = vst.msk [vmem:[%s639 - $0x2] sm:$0xc] %vm369, %v1036
    %v1043 = vld [vmem:[%s373] sm:$0xf]
    %v1044 = vld [vmem:[%s371] sm:$0xf]
    %v1046 = vcombine.low %v1044, %v1044
    %v1048 = vunpack.c.l.s4 1983009808
    %v1049 = vunpack.c.0.s8 %v1048
    %v1050 = vlaneseq
    %v1051 = vshrl.u32 %v1050, 7
    %v1052 = vsub.s32 %v1049, %v1051
    %v1053 = vrot.slane %v1046, %v1052
    %v1054 = vcombine.high %v1053, %v1053
    %1055 = vrot.lane.b32.xlu0 %v1053, 32
    %v1056 = vpop.permute.xlu0 %1055
    %1057 = vrot.lane.b32.xlu0 %v1054, 32
    %v1058 = vpop.permute.xlu0 %1057
    %v1059 = vsel %vm69, %v1056, %v1058
    %v1061 = vsel %vm201, %v1043, %v1059
    %v1062 = vsel %vm69, %v1039, 0.0
    %v1063 = vrot.slane %v1036, 2
    %v1065 = vsel %vm69, 0.0, %v1063
    %v1067 = vrot.slane %v1065, 6
    %v1069 = vsel %vm201, %v1062, %v1067
    %v1071 = vsel %vm259, %v1069, 0
    %1073 = vmatprep.subr.mxu0 0.0
    %1074 = vmatpush1.msra.mxu0 0.0
    %1075 = vmatprep.subr.mxu0 0.0
    %1076 = vmatpush1.msra.mxu0 0.0
    %1077 = vmatprep.subr.mxu0 0.0
    %1078 = vmatpush1.msra.mxu0 0.0
    %1079 = vmatprep.subr.mxu0 0.0
    %1080 = vmatpush1.msra.mxu0 0.0
    %1081 = vmatprep.subr.mxu0 0.0
    %1082 = vmatpush1.msra.mxu0 0.0
    %1083 = vmatprep.subr.mxu0 0.0
    %1084 = vmatpush1.msra.mxu0 0.0
    %1085 = vmatprep.subr.mxu0 0.0
    %1086 = vmatpush1.msra.mxu0 0.0
    %1087 = vmatprep.subr.mxu0 0.0
    %1088 = vmatpush1.msra.mxu0 0.0
    %1089 = vmatprep.subr.mxu0 0.0
    %1090 = vmatpush1.msra.mxu0 %v219
    %1091 = vmatprep.subr.mxu0 0.0
    %1092 = vmatpush1.msra.mxu0 %v218
    %1093 = vmatprep.subr.mxu0 0.0
    %1094 = vmatpush1.msra.mxu0 %v217
    %1095 = vmatprep.subr.mxu0 0.0
    %1096 = vmatpush1.msra.mxu0 %v216
    %1097 = vmatprep.subr.mxu0 0.0
    %1098 = vmatpush1.msra.mxu0 %v215
    %1099 = vmatprep.subr.mxu0 0.0
    %1100 = vmatpush1.msra.mxu0 %v214
    %1101 = vmatprep.subr.mxu0 0.0
    %1102 = vmatpush1.msra.mxu0 %v213
    %1103 = vmatprep.subr.mxu0 0.0
    %1104 = vmatpush1.msra.mxu0 %v212
    %1105 = vmatprep.subr.mxu0 0.0
    %1106 = vmatpush2.msra.mxu0 0.0
    %1107 = vmatprep.subr.mxu0 0.0
    %1108 = vmatpush2.msra.mxu0 0.0
    %1109 = vmatprep.subr.mxu0 0.0
    %1110 = vmatpush2.msra.mxu0 0.0
    %1111 = vmatprep.subr.mxu0 0.0
    %1112 = vmatpush2.msra.mxu0 0.0
    %1113 = vmatprep.subr.mxu0 0.0
    %1114 = vmatpush2.msra.mxu0 0.0
    %1115 = vmatprep.subr.mxu0 0.0
    %1116 = vmatpush2.msra.mxu0 0.0
    %1117 = vmatprep.subr.mxu0 0.0
    %1118 = vmatpush2.msra.mxu0 0.0
    %1119 = vmatprep.subr.mxu0 0.0
    %1120 = vmatpush2.msra.mxu0 0.0
    %1121 = vmatprep.subr.mxu0 0.0
    %1122 = vmatpush2.msra.mxu0 0.0
    %1123 = vmatprep.subr.mxu0 0.0
    %1124 = vmatpush2.msra.mxu0 0.0
    %1125 = vmatprep.subr.mxu0 0.0
    %1126 = vmatpush2.msra.mxu0 0.0
    %1127 = vmatprep.subr.mxu0 0.0
    %1128 = vmatpush2.msra.mxu0 0.0
    %1129 = vmatprep.subr.mxu0 0.0
    %1130 = vmatpush2.msra.mxu0 0.0
    %1131 = vmatprep.subr.mxu0 0.0
    %1132 = vmatpush2.msra.mxu0 0.0
    %1133 = vmatprep.subr.mxu0 0.0
    %1134 = vmatpush2.msra.mxu0 0.0
    %1135 = vmatprep.subr.mxu0 0.0
    %1136 = vmatpush2.msra.mxu0 0.0
    %1137 = vmatprep.mubr.f32.mxu0 0.0
    %1138 = vmatmul.mubr.f32.gmra.mxu0 %v1071
    %v1139 = vpop.f32.mrf.mxu0
    %v1140 = vadd.f32 %v234, %v1139
    %v1141 = vpop.f32.mrf.mxu0
    %1142 = vdwg.mxu0
    %v1143 = vadd.f32 %v1061, %v1140
    %v1144 = vxor.u32 %v1143, 2147483648
    %v1145 = vmul.f32 %v1144, 1.442695
    %v1146 = vpow.pop %v1145
    %v1147 = vadd.f32 %v1146, 1.0
    %v1148 = vrcp.pop %v1147
    %v1149 = vmul.f32 1.0, %v1148
    %1151 = vrot.lane.b32.xlu0 %v1140, 64
    %v1152 = vpop.permute.xlu0 %1151
    %v1154 = vmul.f32 %v1149, %v1152
    %1156 = vrot.lane.b32.xlu0 %v1154, 64
    %v1157 = vpop.permute.xlu0 %1156
    %v1159 = vadd.f32 %v1061, %v1157
    %v1160 = vtanh.pop %v1159
    %v1161 = vsub.f32 1.0, %v1149
    %1163 = vrot.lane.b32.xlu0 %v1160, 96
    %v1164 = vpop.permute.xlu0 %1163
    %v1166 = vmul.f32 %v1161, %v1164
    %v1167 = vmul.f32 %v1149, %v1036
    %v1168 = vadd.f32 %v1166, %v1167
    %1170 = vrot.lane.b32.xlu0 %v1168, 96
    %v1171 = vpop.permute.xlu0 %1170
    %1173 = vst.msk [vmem:[%s505] sm:$0x3] %vm366, %v1171
    %1174 = vst.msk [vmem:[%s503 - $0x2] sm:$0xc] %vm369, %v1168
    %v1175 = vld [vmem:[%s236] sm:$0xf]
    %v1176 = vld [vmem:[#allocation2] sm:$0xf]
    %v1178 = vcombine.low %v1176, %v1176
    %v1180 = vunpack.c.l.s4 1983009808
    %v1181 = vunpack.c.0.s8 %v1180
    %v1182 = vlaneseq
    %v1183 = vshrl.u32 %v1182, 7
    %v1184 = vsub.s32 %v1181, %v1183
    %v1185 = vrot.slane %v1178, %v1184
    %v1186 = vcombine.high %v1185, %v1185
    %1187 = vrot.lane.b32.xlu0 %v1185, 32
    %v1188 = vpop.permute.xlu0 %1187
    %1189 = vrot.lane.b32.xlu0 %v1186, 32
    %v1190 = vpop.permute.xlu0 %1189
    %v1191 = vsel %vm69, %v1188, %v1190
    %v1193 = vsel %vm201, %v1175, %v1191
    %v1194 = vsel %vm69, %v1171, 0.0
    %v1195 = vrot.slane %v1168, 2
    %v1197 = vsel %vm69, 0.0, %v1195
    %v1199 = vrot.slane %v1197, 6
    %v1201 = vsel %vm201, %v1194, %v1199
    %v1203 = vsel %vm259, %v1201, 0
    %1205 = vmatprep.subr.mxu0 0.0
    %1206 = vmatpush1.msra.mxu0 0.0
    %1207 = vmatprep.subr.mxu0 0.0
    %1208 = vmatpush1.msra.mxu0 0.0
    %1209 = vmatprep.subr.mxu0 0.0
    %1210 = vmatpush1.msra.mxu0 0.0
    %1211 = vmatprep.subr.mxu0 0.0
    %1212 = vmatpush1.msra.mxu0 0.0
    %1213 = vmatprep.subr.mxu0 0.0
    %1214 = vmatpush1.msra.mxu0 0.0
    %1215 = vmatprep.subr.mxu0 0.0
    %1216 = vmatpush1.msra.mxu0 0.0
    %1217 = vmatprep.subr.mxu0 0.0
    %1218 = vmatpush1.msra.mxu0 0.0
    %1219 = vmatprep.subr.mxu0 0.0
    %1220 = vmatpush1.msra.mxu0 0.0
    %1221 = vmatprep.subr.mxu0 0.0
    %1222 = vmatpush1.msra.mxu0 %v219
    %1223 = vmatprep.subr.mxu0 0.0
    %1224 = vmatpush1.msra.mxu0 %v218
    %1225 = vmatprep.subr.mxu0 0.0
    %1226 = vmatpush1.msra.mxu0 %v217
    %1227 = vmatprep.subr.mxu0 0.0
    %1228 = vmatpush1.msra.mxu0 %v216
    %1229 = vmatprep.subr.mxu0 0.0
    %1230 = vmatpush1.msra.mxu0 %v215
    %1231 = vmatprep.subr.mxu0 0.0
    %1232 = vmatpush1.msra.mxu0 %v214
    %1233 = vmatprep.subr.mxu0 0.0
    %1234 = vmatpush1.msra.mxu0 %v213
    %1235 = vmatprep.subr.mxu0 0.0
    %1236 = vmatpush1.msra.mxu0 %v212
    %1237 = vmatprep.subr.mxu0 0.0
    %1238 = vmatpush2.msra.mxu0 0.0
    %1239 = vmatprep.subr.mxu0 0.0
    %1240 = vmatpush2.msra.mxu0 0.0
    %1241 = vmatprep.subr.mxu0 0.0
    %1242 = vmatpush2.msra.mxu0 0.0
    %1243 = vmatprep.subr.mxu0 0.0
    %1244 = vmatpush2.msra.mxu0 0.0
    %1245 = vmatprep.subr.mxu0 0.0
    %1246 = vmatpush2.msra.mxu0 0.0
    %1247 = vmatprep.subr.mxu0 0.0
    %1248 = vmatpush2.msra.mxu0 0.0
    %1249 = vmatprep.subr.mxu0 0.0
    %1250 = vmatpush2.msra.mxu0 0.0
    %1251 = vmatprep.subr.mxu0 0.0
    %1252 = vmatpush2.msra.mxu0 0.0
    %1253 = vmatprep.subr.mxu0 0.0
    %1254 = vmatpush2.msra.mxu0 0.0
    %1255 = vmatprep.subr.mxu0 0.0
    %1256 = vmatpush2.msra.mxu0 0.0
    %1257 = vmatprep.subr.mxu0 0.0
    %1258 = vmatpush2.msra.mxu0 0.0
    %1259 = vmatprep.subr.mxu0 0.0
    %1260 = vmatpush2.msra.mxu0 0.0
    %1261 = vmatprep.subr.mxu0 0.0
    %1262 = vmatpush2.msra.mxu0 0.0
    %1263 = vmatprep.subr.mxu0 0.0
    %1264 = vmatpush2.msra.mxu0 0.0
    %1265 = vmatprep.subr.mxu0 0.0
    %1266 = vmatpush2.msra.mxu0 0.0
    %1267 = vmatprep.subr.mxu0 0.0
    %1268 = vmatpush2.msra.mxu0 0.0
    %1269 = vmatprep.mubr.f32.mxu0 0.0
    %1270 = vmatmul.mubr.f32.gmra.mxu0 %v1203
    %v1271 = vpop.f32.mrf.mxu0
    %v1272 = vadd.f32 %v234, %v1271
    %v1273 = vpop.f32.mrf.mxu0
    %1274 = vdwg.mxu0
    %v1275 = vadd.f32 %v1193, %v1272
    %v1276 = vxor.u32 %v1275, 2147483648
    %v1277 = vmul.f32 %v1276, 1.442695
    %v1278 = vpow.pop %v1277
    %v1279 = vadd.f32 %v1278, 1.0
    %v1280 = vrcp.pop %v1279
    %v1281 = vmul.f32 1.0, %v1280
    %1283 = vrot.lane.b32.xlu0 %v1272, 64
    %v1284 = vpop.permute.xlu0 %1283
    %v1286 = vmul.f32 %v1281, %v1284
    %1288 = vrot.lane.b32.xlu0 %v1286, 64
    %v1289 = vpop.permute.xlu0 %1288
    %v1291 = vadd.f32 %v1193, %v1289
    %v1292 = vtanh.pop %v1291
    %v1293 = vsub.f32 1.0, %v1281
    %1295 = vrot.lane.b32.xlu0 %v1292, 96
    %v1296 = vpop.permute.xlu0 %1295
    %v1298 = vmul.f32 %v1293, %v1296
    %v1299 = vmul.f32 %v1281, %v1168
    %v1300 = vadd.f32 %v1298, %v1299
    %1302 = vrot.lane.b32.xlu0 %v1300, 96
    %v1303 = vpop.permute.xlu0 %1302
    %1305 = vst.msk [vmem:[%s368] sm:$0x3] %vm366, %v1303
    %1306 = vst.msk [vmem:[#allocation6 - $0x2] sm:$0xc] %vm369, %v1300
    %v1307 = vrot.slane %v1300, 2
    %v1309 = vsel %vm69, %v1303, %v1307
    %v1310 = vld [vmem:[%s6] sm:$0xff]
    %v1311 = vld [vmem:[%s6 + $0x8] sm:$0xff]
    %v1312 = vld [vmem:[%s6 + $0x10] sm:$0xff]
    %v1313 = vld [vmem:[%s6 + $0x18] sm:$0xff]
    %v1314 = vld [vmem:[%s6 + $0x20] sm:$0xff]
    %v1315 = vld [vmem:[%s6 + $0x28] sm:$0xff]
    %v1316 = vld [vmem:[%s6 + $0x30] sm:$0xff]
    %v1317 = vld [vmem:[%s6 + $0x38] sm:$0xff]
    %v1318 = vld [vmem:[%s7] sm:$0x1]
    %v1320 = vlaneseq
    %v1321 = vshrl.u32 %v1320, 7
    %v1322 = vsub.s32 0, %v1321
    %v1323 = vrot.slane %v1318, %v1322
    %v1326 = vsel %vm259, %v1309, 0
    %1328 = vmatprep.subr.mxu0 0.0
    %1329 = vmatpush1.msra.mxu0 0.0
    %1330 = vmatprep.subr.mxu0 0.0
    %1331 = vmatpush1.msra.mxu0 0.0
    %1332 = vmatprep.subr.mxu0 0.0
    %1333 = vmatpush1.msra.mxu0 0.0
    %1334 = vmatprep.subr.mxu0 0.0
    %1335 = vmatpush1.msra.mxu0 0.0
    %1336 = vmatprep.subr.mxu0 0.0
    %1337 = vmatpush1.msra.mxu0 0.0
    %1338 = vmatprep.subr.mxu0 0.0
    %1339 = vmatpush1.msra.mxu0 0.0
    %1340 = vmatprep.subr.mxu0 0.0
    %1341 = vmatpush1.msra.mxu0 0.0
    %1342 = vmatprep.subr.mxu0 0.0
    %1343 = vmatpush1.msra.mxu0 0.0
    %1344 = vmatprep.subr.mxu0 0.0
    %1345 = vmatpush1.msra.mxu0 %v1317
    %1346 = vmatprep.subr.mxu0 0.0
    %1347 = vmatpush1.msra.mxu0 %v1316
    %1348 = vmatprep.subr.mxu0 0.0
    %1349 = vmatpush1.msra.mxu0 %v1315
    %1350 = vmatprep.subr.mxu0 0.0
    %1351 = vmatpush1.msra.mxu0 %v1314
    %1352 = vmatprep.subr.mxu0 0.0
    %1353 = vmatpush1.msra.mxu0 %v1313
    %1354 = vmatprep.subr.mxu0 0.0
    %1355 = vmatpush1.msra.mxu0 %v1312
    %1356 = vmatprep.subr.mxu0 0.0
    %1357 = vmatpush1.msra.mxu0 %v1311
    %1358 = vmatprep.subr.mxu0 0.0
    %1359 = vmatpush1.msra.mxu0 %v1310
    %1360 = vmatprep.subr.mxu0 0.0
    %1361 = vmatpush2.msra.mxu0 0.0
    %1362 = vmatprep.subr.mxu0 0.0
    %1363 = vmatpush2.msra.mxu0 0.0
    %1364 = vmatprep.subr.mxu0 0.0
    %1365 = vmatpush2.msra.mxu0 0.0
    %1366 = vmatprep.subr.mxu0 0.0
    %1367 = vmatpush2.msra.mxu0 0.0
    %1368 = vmatprep.subr.mxu0 0.0
    %1369 = vmatpush2.msra.mxu0 0.0
    %1370 = vmatprep.subr.mxu0 0.0
    %1371 = vmatpush2.msra.mxu0 0.0
    %1372 = vmatprep.subr.mxu0 0.0
    %1373 = vmatpush2.msra.mxu0 0.0
    %1374 = vmatprep.subr.mxu0 0.0
    %1375 = vmatpush2.msra.mxu0 0.0
    %1376 = vmatprep.subr.mxu0 0.0
    %1377 = vmatpush2.msra.mxu0 0.0
    %1378 = vmatprep.subr.mxu0 0.0
    %1379 = vmatpush2.msra.mxu0 0.0
    %1380 = vmatprep.subr.mxu0 0.0
    %1381 = vmatpush2.msra.mxu0 0.0
    %1382 = vmatprep.subr.mxu0 0.0
    %1383 = vmatpush2.msra.mxu0 0.0
    %1384 = vmatprep.subr.mxu0 0.0
    %1385 = vmatpush2.msra.mxu0 0.0
    %1386 = vmatprep.subr.mxu0 0.0
    %1387 = vmatpush2.msra.mxu0 0.0
    %1388 = vmatprep.subr.mxu0 0.0
    %1389 = vmatpush2.msra.mxu0 0.0
    %1390 = vmatprep.subr.mxu0 0.0
    %1391 = vmatpush2.msra.mxu0 0.0
    %1392 = vmatprep.mubr.f32.mxu0 0.0
    %1393 = vmatmul.mubr.f32.gmra.mxu0 %v1326
    %v1394 = vpop.f32.mrf.mxu0
    %v1395 = vadd.f32 %v1323, %v1394
    %v1396 = vpop.f32.mrf.mxu0
    %1397 = vdwg.mxu0
    %v1398 = vtanh.pop %v1395
    %1399 = vst.msk [vmem:[#allocation7] sm:$0x3] %vm366, %v1398
    // Predicated region
    $region38: #{tpu_custom_call.1} parent=1 // pred_check
      _
    $region39: #{tpu_custom_call.1} parent=1 // pred_check_branch
      %1401 = sbr.rel (0) target = $region41
    $region40: #{tpu_custom_call.1} parent=1 // pred_region
      %s1403 = ssub.s32 256, 256
      %1404 = vsyncadd [#allocation5], %s1403
      %s1405 = sshll.u32 [#allocation6], 4
      %s1406 = int_to_ptr.vmem [resolvable:$true] %s1405
      %1411 = dma.vmem_to_hbm [thread:$0]  %s1406, 256, %s8, [#allocation5], 32, 32, 2
    $region41: #{tpu_custom_call.1} parent=1 // pred_fallthru
      _
    // Predicated region
    $region42: #{tpu_custom_call.1} parent=1 // pred_check
      _
    $region43: #{tpu_custom_call.1} parent=1 // pred_check_branch
      %1413 = sbr.rel (0) target = $region45
    $region44: #{tpu_custom_call.1} parent=1 // pred_region
      %s1415 = ssub.s32 32, 32
      %1416 = vsyncadd [#allocation8], %s1415
      %s1418 = sshll.u32 [#allocation7], 4
      %s1419 = int_to_ptr.vmem [resolvable:$true] %s1418
      %1421 = dma.vmem_to_hbm [thread:$0]  %s1419, 32, %s9, [#allocation8]
    $region45: #{tpu_custom_call.1} parent=1 // pred_fallthru
      _
    // Predicated region
    $region46: #{tpu_custom_call.1} parent=1 // pred_check
      _
    $region47: #{tpu_custom_call.1} parent=1 // pred_check_branch
      %1423 = sbr.rel (0) target = $region49
    $region48: #{tpu_custom_call.1} parent=1 // pred_region
      %1424 = dma.done [#allocation5], 256
    $region49: #{tpu_custom_call.1} parent=1 // pred_fallthru
      _
    // Predicated region
    $region50: #{tpu_custom_call.1} parent=1 // pred_check
      _
    $region51: #{tpu_custom_call.1} parent=1 // pred_check_branch
      %1426 = sbr.rel (0) target = $region53
    $region52: #{tpu_custom_call.1} parent=1 // pred_region
      %1427 = dma.done [#allocation8], 32
    $region53: #{tpu_custom_call.1} parent=1 // pred_fallthru
      _
    %1428 = vsyncpa [#allocation4], 1
    %1429 = vsyncpa [#allocation5], 1
    %1430 = vsyncpa [#allocation8], 1

</llo_original>
